<compile_context>
chip_gen: v7x
topology: tpu7x:2x2x1
jax: 0.10.0
libtpu: 0.0.40
codegen_flags: <defaults>
</compile_context>

<pallas_src>
import functools
import math

import jax
import jax.numpy as jnp
from jax import lax
from jax.experimental import pallas as pl
from jax.experimental.pallas import tpu as pltpu


# ----------------------------------------------------------------------------
# tiling helpers
# ----------------------------------------------------------------------------
def _pick_row_tile(N, H, W):
    """Input rows per grid step (each produces 2*TR output rows)."""
    cap = max(1, 256 // max(W, 1))                 # keep flattened dot M <= ~256
    divs = [d for d in range(1, H + 1) if H % d == 0]
    cands = [d for d in divs if d <= cap] or [1]
    mult8 = [d for d in cands if d % 8 == 0]
    tr = max(mult8) if mult8 else max(cands)
    # v7x megacore: keep >= 2 parallel programs by splitting rows (not shrinking to 1).
    if N * (H // tr) < 2:
        smaller = [d for d in cands if H // d >= 2]
        if smaller:
            m8 = [d for d in smaller if d % 8 == 0]
            tr = max(m8) if m8 else max(smaller)
    return tr


# ----------------------------------------------------------------------------
# fused kernel: upsample-folded conv (2 row phases, column phases fused into
# the weight matrix) + folded-BN bias + HSwish
# ----------------------------------------------------------------------------
def _up_conv_kernel(x_ref, w_ref, b_ref, o_ref, *, TR, W, Cin, Cout):
    # x_ref: (1, H+2, W+2, Cin) f32  -- zero-padded ORIGINAL image (not upsampled), resident
    # w_ref: (2, 6*Cin, 2*Cout) bf16 -- per row-phase, column-phase-fused, BN-folded weights
    # b_ref: (1, 2*Cout)        f32  -- folded BN bias, tiled over the two column phases
    # o_ref: (1, 2, TR, W, 2*Cout) f32 -- per row-phase, column-interleaved output rows
    r0 = pl.multiple_of(pl.program_id(1) * TR, TR)
    strip = x_ref[0, pl.ds(r0, TR + 2), :, :]               # (TR+2, W+2, Cin) halo row strip

    for a in range(2):                                      # sub-pixel row phase (unrolled)
        rows = strip[a:a + TR + 1]                          # (TR+1, W+2, Cin)
        # Shifted-patch slab; contraction order (row tap t, window col j, cin)
        # matches the weight flattening done in the wrapper.
        patches = jnp.concatenate(
            [rows[t:t + TR, j:j + W, :] for t in range(2) for j in range(3)],
            axis=-1)                                        # (TR, W, 6*Cin) f32
        patches = patches.reshape(TR * W, 6 * Cin).astype(jnp.bfloat16)   # MXU operand
        y = jnp.dot(patches, w_ref[a],
                    preferred_element_type=jnp.float32)     # (TR*W, 2*Cout) f32 on the MXU
        y = y + b_ref[...]                                  # folded BN bias (f32 epilogue)
        y = y * jnp.clip(y + 3.0, 0.0, 6.0) * (1.0 / 6.0)   # HSwish, f32 (v5e-safe)
        # Leading-split reshape only (last dim unchanged) -> safe lowering.
        # TODO(synk): store as (TR, W*2*Cout) for fully 128-lane-dense vst once the
        # (TR*W, 2*Cout) -> (TR, W*2*Cout) in-kernel relayout is verified on Mosaic.
        o_ref[0, a] = y.reshape(TR, W, 2 * Cout)


@functools.lru_cache(maxsize=None)
def _up_conv_fn(N, H, W, Cin, Cout, TR):
    Hp, Wp = H + 2, W + 2
    kernel = functools.partial(_up_conv_kernel, TR=TR, W=W, Cin=Cin, Cout=Cout)

    # VMEM budget (generous): resident padded image + weights + out block + temporaries.
    img = Hp * Wp * Cin * 4
    wts = 2 * 6 * Cin * 2 * Cout * 2
    out_blk = 2 * TR * W * 2 * Cout * 4
    tmp = 2 * TR * W * (6 * Cin * 6 + 2 * Cout * 4)
    vmem_limit = int(min(max(2 * (2 * img + 2 * out_blk + tmp + wts) + (1 << 20),
                             32 << 20), 64 << 20))

    return pl.pallas_call(
        kernel,
        grid=(N, H // TR),
        in_specs=[
            # Full padded (NOT upsampled) image per batch; block index is constant over
            # the row-tile axis so it stays resident across the inner grid loop.
            # TODO(synk): switch to manual double-buffered halo row-strip DMA (pl.ANY)
            # for very large feature maps on v7x's 64 MiB VMEM.
            pl.BlockSpec((1, Hp, Wp, Cin), lambda n, t: (n, 0, 0, 0)),
            pl.BlockSpec((2, 6 * Cin, 2 * Cout), lambda n, t: (0, 0, 0)),
            pl.BlockSpec((1, 2 * Cout), lambda n, t: (0, 0)),
        ],
        out_specs=pl.BlockSpec((1, 2, TR, W, 2 * Cout), lambda n, t: (n, 0, t, 0, 0)),
        out_shape=jax.ShapeDtypeStruct((N, 2, H, W, 2 * Cout), jnp.float32),
        compiler_params=pltpu.CompilerParams(
            dimension_semantics=("parallel", "parallel"),
            vmem_limit_bytes=vmem_limit),
    )


# ----------------------------------------------------------------------------
# parameter folding: eval-mode BN + nearest-2x upsample -> per-phase weights
# ----------------------------------------------------------------------------
def _fold_weights(params):
    w = params["w"]                                          # (Cout, Cin, 3, 3) torch layout
    Cout, Cin, K, _ = w.shape
    scale = params["gamma"] * lax.rsqrt(params["var"] + params["eps"])
    bias = params["beta"] - params["mean"] * scale
    wk = jnp.transpose(w * scale[:, None, None, None], (2, 3, 1, 0))   # (kh, kw, Cin, Cout)

    # Nearest-2x upsample folding: for output row 2r+a the 3 kernel rows collapse
    # onto 2 input-row taps (padded rows {r+a, r+a+1}).  Same for columns.
    row_taps = [
        [wk[0],         wk[1] + wk[2]],      # a = 0
        [wk[0] + wk[1], wk[2]],              # a = 1
    ]

    def col_fuse(g):   # g: (kw, Cin, Cout) -> (3 window cols, Cin, 2*Cout) [b=0 | b=1]
        z = jnp.zeros_like(g[0])
        b0 = jnp.stack([g[0], g[1] + g[2], z], axis=0)       # output col 2c   uses window cols 0,1
        b1 = jnp.stack([z, g[0] + g[1], g[2]], axis=0)       # output col 2c+1 uses window cols 1,2
        return jnp.concatenate([b0, b1], axis=-1)

    w_mat = jnp.stack(
        [jnp.stack([col_fuse(row_taps[a][t]) for t in range(2)], axis=0)   # (2, 3, Cin, 2*Cout)
         for a in range(2)], axis=0)                                       # (2, 2, 3, Cin, 2*Cout)
    w_mat = w_mat.reshape(2, 6 * Cin, 2 * Cout).astype(jnp.bfloat16)       # MXU operand
    b_mat = jnp.tile(bias, 2).reshape(1, 2 * Cout).astype(jnp.float32)
    return w_mat, b_mat


# ----------------------------------------------------------------------------
# UpModule forward (NCHW in / NCHW out, PyTorch semantics, eval-mode BN)
# ----------------------------------------------------------------------------
def up_module_forward(params, x_nchw):
    Cout, Cin, K, _ = params["w"].shape
    assert K == 3, "UpModule uses a fixed 3x3 conv"
    w_mat, b_mat = _fold_weights(params)

    # NCHW -> NHWC + 1-px zero pad of the ORIGINAL (not upsampled) image.
    # TODO(synk): keep NHWC end-to-end in the surrounding model to drop these transposes.
    x = jnp.transpose(x_nchw, (0, 2, 3, 1))
    N, H, W, _ = x.shape
    x_pad = jnp.pad(x, ((0, 0), (1, 1), (1, 1), (0, 0)))     # f32; bf16 cast happens in-kernel

    TR = _pick_row_tile(N, H, W)
    y = _up_conv_fn(N, H, W, Cin, Cout, TR)(x_pad, w_mat, b_mat)

    # (N, 2[a], H, W, 2[b], Cout) -> NCHW with Ho = 2r+a, Wo = 2c+b; one fused transpose.
    y = y.reshape(N, 2, H, W, 2, Cout)
    y = jnp.transpose(y, (0, 5, 2, 1, 3, 4)).reshape(N, Cout, 2 * H, 2 * W)
    return y


# ----------------------------------------------------------------------------
# pure-JAX reference (f32) for a correctness sanity check
# ----------------------------------------------------------------------------
def _reference(params, x_nchw):
    w = params["w"]
    scale = params["gamma"] / jnp.sqrt(params["var"] + params["eps"])
    bias = params["beta"] - params["mean"] * scale
    x = jnp.transpose(x_nchw, (0, 2, 3, 1))
    x_up = jnp.repeat(jnp.repeat(x, 2, axis=1), 2, axis=2)
    y = lax.conv_general_dilated(
        x_up, jnp.transpose(w, (2, 3, 1, 0)),                # HWIO
        window_strides=(1, 1), padding="SAME",
        dimension_numbers=("NHWC", "HWIO", "NHWC"))
    y = y * scale + bias
    y = y * jnp.clip(y + 3.0, 0.0, 6.0) / 6.0
    return jnp.transpose(y, (0, 3, 1, 2))


# ----------------------------------------------------------------------------
if __name__ == "__main__":
    key = jax.random.PRNGKey(0)
    k1, k2, k3, k4, k5 = jax.random.split(key, 5)

    # UpModule(24, 24) as used inside DBFace; small deterministic shapes.
    N, Cin, H, W = 2, 24, 16, 16
    Cout, K = 24, 3

    x = jax.random.normal(k1, (N, Cin, H, W), jnp.float32)
    fan_in = Cin * K * K
    params = {
        "w": jax.random.normal(k2, (Cout, Cin, K, K), jnp.float32)
             * (1.0 / math.sqrt(fan_in)),
        "gamma": 1.0 + 0.1 * jax.random.normal(k3, (Cout,), jnp.float32),
        "beta": 0.1 * jax.random.normal(k4, (Cout,), jnp.float32),
        "mean": 0.1 * jax.random.normal(k5, (Cout,), jnp.float32),
        "var": jnp.ones((Cout,), jnp.float32),
        "eps": jnp.float32(1e-5),
    }

    fwd = jax.jit(up_module_forward)          # single top-level jit
    y = fwd(params, x)
    jax.block_until_ready(y)

    assert y.shape == (N, Cout, 2 * H, 2 * W), y.shape

    # correctness vs f32 reference (Pallas path uses bf16 MXU operands,
    # f32 accumulation -> loose tolerance)
    y_ref = _reference(params, x)
    max_err = float(jnp.max(jnp.abs(y - y_ref)))
    assert max_err < 0.1, f"max abs error {max_err}"

    print("KERNEL_OK")
</pallas_src>

<mosaic_0001>
module attributes {stable_mosaic.version = 11 : i64} {
  func.func @_up_conv_kernel(%arg0: i32, %arg1: i32, %arg2: memref<1x18x18x24xf32, #tpu.memory_space<vmem>>, %arg3: memref<2x144x48xbf16, #tpu.memory_space<vmem>>, %arg4: memref<1x48xf32, #tpu.memory_space<vmem>>, %arg5: memref<1x2x16x16x48xf32, #tpu.memory_space<vmem>>) attributes {dimension_semantics = [#tpu.dimension_semantics<parallel>, #tpu.dimension_semantics<parallel>], iteration_bounds = array<i64: 2, 1>, scalar_prefetch = 0 : i64, scratch_operands = 0 : i64, tpu.core_type = #tpu.core_type<tc>, window_params = [{transform_indices = @transform_0, window_bounds = array<i64: 1, 18, 18, 24>}, {pipeline_mode = #tpu.pipeline_mode<synchronous>, transform_indices = @transform_1, window_bounds = array<i64: 2, 144, 48>}, {pipeline_mode = #tpu.pipeline_mode<synchronous>, transform_indices = @transform_2, window_bounds = array<i64: 1, 48>}, {transform_indices = @transform_3, window_bounds = array<i64: 1, 2, 16, 16, 48>}]} {
    %c16_i32 = arith.constant 16 : i32
    %0 = arith.muli %arg1, %c16_i32 : i32
    %1 = tpu.assume_multiple %0, 16 : i32
    %c0 = arith.constant 0 : index
    %2 = arith.index_cast %1 : i32 to index
    %c0_0 = arith.constant 0 : index
    %c0_1 = arith.constant 0 : index
    %3 = vector.load %arg2[%c0, %2, %c0_0, %c0_1] : memref<1x18x18x24xf32, #tpu.memory_space<vmem>>, vector<1x18x18x24xf32>
    %4 = vector.shape_cast %3 : vector<1x18x18x24xf32> to vector<18x18x24xf32>
    %5 = vector.extract_strided_slice %4 {offsets = [0, 0, 0], sizes = [17, 18, 24], strides = [1, 1, 1]} : vector<18x18x24xf32> to vector<17x18x24xf32>
    %6 = vector.extract_strided_slice %5 {offsets = [0, 0, 0], sizes = [16, 16, 24], strides = [1, 1, 1]} : vector<17x18x24xf32> to vector<16x16x24xf32>
    %7 = vector.extract_strided_slice %5 {offsets = [0, 1, 0], sizes = [16, 16, 24], strides = [1, 1, 1]} : vector<17x18x24xf32> to vector<16x16x24xf32>
    %8 = vector.extract_strided_slice %5 {offsets = [0, 2, 0], sizes = [16, 16, 24], strides = [1, 1, 1]} : vector<17x18x24xf32> to vector<16x16x24xf32>
    %9 = vector.extract_strided_slice %5 {offsets = [1, 0, 0], sizes = [16, 16, 24], strides = [1, 1, 1]} : vector<17x18x24xf32> to vector<16x16x24xf32>
    %10 = vector.extract_strided_slice %5 {offsets = [1, 1, 0], sizes = [16, 16, 24], strides = [1, 1, 1]} : vector<17x18x24xf32> to vector<16x16x24xf32>
    %11 = vector.extract_strided_slice %5 {offsets = [1, 2, 0], sizes = [16, 16, 24], strides = [1, 1, 1]} : vector<17x18x24xf32> to vector<16x16x24xf32>
    %12 = tpu.concatenate %6, %7, %8, %9, %10, %11 in 2 : vector<16x16x24xf32>, vector<16x16x24xf32>, vector<16x16x24xf32>, vector<16x16x24xf32>, vector<16x16x24xf32>, vector<16x16x24xf32> -> vector<16x16x144xf32>
    %13 = vector.shape_cast %12 : vector<16x16x144xf32> to vector<256x144xf32>
    %14 = arith.truncf %13 : vector<256x144xf32> to vector<256x144xbf16>
    %c0_2 = arith.constant 0 : index
    %c0_3 = arith.constant 0 : index
    %c0_4 = arith.constant 0 : index
    %15 = vector.load %arg3[%c0_2, %c0_3, %c0_4] : memref<2x144x48xbf16, #tpu.memory_space<vmem>>, vector<1x144x48xbf16>
    %16 = vector.shape_cast %15 : vector<1x144x48xbf16> to vector<144x48xbf16>
    %cst = arith.constant dense<0.000000e+00> : vector<256x48xf32>
    %17 = tpu.matmul %14, %16, %cst {dimension_numbers = #tpu.dot_dimension_numbers<[1], [0], [0], [1], [0, 0, 1, 1], [], []>} : vector<256x144xbf16>, vector<144x48xbf16>, vector<256x48xf32> -> vector<256x48xf32>
    %c0_5 = arith.constant 0 : index
    %c0_6 = arith.constant 0 : index
    %18 = vector.load %arg4[%c0_5, %c0_6] : memref<1x48xf32, #tpu.memory_space<vmem>>, vector<1x48xf32>
    %19 = vector.broadcast %18 : vector<1x48xf32> to vector<256x48xf32>
    %20 = arith.addf %17, %19 : vector<256x48xf32>
    %cst_7 = arith.constant 3.000000e+00 : f32
    %21 = vector.broadcast %cst_7 : f32 to vector<256x48xf32>
    %22 = arith.addf %20, %21 : vector<256x48xf32>
    %cst_8 = arith.constant 0.000000e+00 : f32
    %cst_9 = arith.constant 6.000000e+00 : f32
    %23 = vector.broadcast %cst_8 : f32 to vector<256x48xf32>
    %24 = arith.maximumf %23, %22 : vector<256x48xf32>
    %25 = vector.broadcast %cst_9 : f32 to vector<256x48xf32>
    %26 = arith.minimumf %25, %24 : vector<256x48xf32>
    %27 = arith.mulf %20, %26 : vector<256x48xf32>
    %cst_10 = arith.constant 0.166666672 : f32
    %28 = vector.broadcast %cst_10 : f32 to vector<256x48xf32>
    %29 = arith.mulf %27, %28 : vector<256x48xf32>
    %30 = vector.shape_cast %29 : vector<256x48xf32> to vector<16x16x48xf32>
    %c0_11 = arith.constant 0 : index
    %c0_12 = arith.constant 0 : index
    %c0_13 = arith.constant 0 : index
    %c0_14 = arith.constant 0 : index
    %c0_15 = arith.constant 0 : index
    %31 = vector.load %arg5[%c0_11, %c0_12, %c0_13, %c0_14, %c0_15] : memref<1x2x16x16x48xf32, #tpu.memory_space<vmem>>, vector<1x1x16x16x48xf32>
    %32 = vector.shape_cast %31 : vector<1x1x16x16x48xf32> to vector<16x16x48xf32>
    %33 = vector.shape_cast %30 : vector<16x16x48xf32> to vector<1x1x16x16x48xf32>
    tpu.vector_store %arg5[%c0_11, %c0_12, %c0_13, %c0_14, %c0_15], %33 {strides = array<i32>} : memref<1x2x16x16x48xf32, #tpu.memory_space<vmem>>, vector<1x1x16x16x48xf32>,
    %34 = vector.extract_strided_slice %4 {offsets = [1, 0, 0], sizes = [17, 18, 24], strides = [1, 1, 1]} : vector<18x18x24xf32> to vector<17x18x24xf32>
    %35 = vector.extract_strided_slice %34 {offsets = [0, 0, 0], sizes = [16, 16, 24], strides = [1, 1, 1]} : vector<17x18x24xf32> to vector<16x16x24xf32>
    %36 = vector.extract_strided_slice %34 {offsets = [0, 1, 0], sizes = [16, 16, 24], strides = [1, 1, 1]} : vector<17x18x24xf32> to vector<16x16x24xf32>
    %37 = vector.extract_strided_slice %34 {offsets = [0, 2, 0], sizes = [16, 16, 24], strides = [1, 1, 1]} : vector<17x18x24xf32> to vector<16x16x24xf32>
    %38 = vector.extract_strided_slice %34 {offsets = [1, 0, 0], sizes = [16, 16, 24], strides = [1, 1, 1]} : vector<17x18x24xf32> to vector<16x16x24xf32>
    %39 = vector.extract_strided_slice %34 {offsets = [1, 1, 0], sizes = [16, 16, 24], strides = [1, 1, 1]} : vector<17x18x24xf32> to vector<16x16x24xf32>
    %40 = vector.extract_strided_slice %34 {offsets = [1, 2, 0], sizes = [16, 16, 24], strides = [1, 1, 1]} : vector<17x18x24xf32> to vector<16x16x24xf32>
    %41 = tpu.concatenate %35, %36, %37, %38, %39, %40 in 2 : vector<16x16x24xf32>, vector<16x16x24xf32>, vector<16x16x24xf32>, vector<16x16x24xf32>, vector<16x16x24xf32>, vector<16x16x24xf32> -> vector<16x16x144xf32>
    %42 = vector.shape_cast %41 : vector<16x16x144xf32> to vector<256x144xf32>
    %43 = arith.truncf %42 : vector<256x144xf32> to vector<256x144xbf16>
    %c1 = arith.constant 1 : index
    %c0_16 = arith.constant 0 : index
    %c0_17 = arith.constant 0 : index
    %44 = vector.load %arg3[%c1, %c0_16, %c0_17] : memref<2x144x48xbf16, #tpu.memory_space<vmem>>, vector<1x144x48xbf16>
    %45 = vector.shape_cast %44 : vector<1x144x48xbf16> to vector<144x48xbf16>
    %cst_18 = arith.constant dense<0.000000e+00> : vector<256x48xf32>
    %46 = tpu.matmul %43, %45, %cst_18 {dimension_numbers = #tpu.dot_dimension_numbers<[1], [0], [0], [1], [0, 0, 1, 1], [], []>} : vector<256x144xbf16>, vector<144x48xbf16>, vector<256x48xf32> -> vector<256x48xf32>
    %c0_19 = arith.constant 0 : index
    %c0_20 = arith.constant 0 : index
    %47 = vector.load %arg4[%c0_19, %c0_20] : memref<1x48xf32, #tpu.memory_space<vmem>>, vector<1x48xf32>
    %48 = vector.broadcast %47 : vector<1x48xf32> to vector<256x48xf32>
    %49 = arith.addf %46, %48 : vector<256x48xf32>
    %cst_21 = arith.constant 3.000000e+00 : f32
    %50 = vector.broadcast %cst_21 : f32 to vector<256x48xf32>
    %51 = arith.addf %49, %50 : vector<256x48xf32>
    %cst_22 = arith.constant 0.000000e+00 : f32
    %cst_23 = arith.constant 6.000000e+00 : f32
    %52 = vector.broadcast %cst_22 : f32 to vector<256x48xf32>
    %53 = arith.maximumf %52, %51 : vector<256x48xf32>
    %54 = vector.broadcast %cst_23 : f32 to vector<256x48xf32>
    %55 = arith.minimumf %54, %53 : vector<256x48xf32>
    %56 = arith.mulf %49, %55 : vector<256x48xf32>
    %cst_24 = arith.constant 0.166666672 : f32
    %57 = vector.broadcast %cst_24 : f32 to vector<256x48xf32>
    %58 = arith.mulf %56, %57 : vector<256x48xf32>
    %59 = vector.shape_cast %58 : vector<256x48xf32> to vector<16x16x48xf32>
    %c0_25 = arith.constant 0 : index
    %c1_26 = arith.constant 1 : index
    %c0_27 = arith.constant 0 : index
    %c0_28 = arith.constant 0 : index
    %c0_29 = arith.constant 0 : index
    %60 = vector.load %arg5[%c0_25, %c1_26, %c0_27, %c0_28, %c0_29] : memref<1x2x16x16x48xf32, #tpu.memory_space<vmem>>, vector<1x1x16x16x48xf32>
    %61 = vector.shape_cast %60 : vector<1x1x16x16x48xf32> to vector<16x16x48xf32>
    %62 = vector.shape_cast %59 : vector<16x16x48xf32> to vector<1x1x16x16x48xf32>
    tpu.vector_store %arg5[%c0_25, %c1_26, %c0_27, %c0_28, %c0_29], %62 {strides = array<i32>} : memref<1x2x16x16x48xf32, #tpu.memory_space<vmem>>, vector<1x1x16x16x48xf32>,
    return
  }
  func.func @transform_0(%arg0: i32, %arg1: i32) -> (i32, i32, i32, i32) {
    %c0_i32 = arith.constant 0 : i32
    %c0_i32_0 = arith.constant 0 : i32
    %c0_i32_1 = arith.constant 0 : i32
    %c0_i32_2 = arith.constant 0 : i32
    return %arg0, %c0_i32, %c0_i32_0, %c0_i32_1 : i32, i32, i32, i32
  }
  func.func @transform_1(%arg0: i32, %arg1: i32) -> (i32, i32, i32) {
    %c0_i32 = arith.constant 0 : i32
    %c0_i32_0 = arith.constant 0 : i32
    %c0_i32_1 = arith.constant 0 : i32
    %c0_i32_2 = arith.constant 0 : i32
    return %c0_i32, %c0_i32_0, %c0_i32_1 : i32, i32, i32
  }
  func.func @transform_2(%arg0: i32, %arg1: i32) -> (i32, i32) {
    %c0_i32 = arith.constant 0 : i32
    %c0_i32_0 = arith.constant 0 : i32
    %c0_i32_1 = arith.constant 0 : i32
    return %c0_i32, %c0_i32_0 : i32, i32
  }
  func.func @transform_3(%arg0: i32, %arg1: i32) -> (i32, i32, i32, i32, i32) {
    %c0_i32 = arith.constant 0 : i32
    %c0_i32_0 = arith.constant 0 : i32
    %c0_i32_1 = arith.constant 0 : i32
    %c0_i32_2 = arith.constant 0 : i32
    return %arg0, %c0_i32, %arg1, %c0_i32_0, %c0_i32_1 : i32, i32, i32, i32, i32
  }
}

</mosaic_0001>

<llo_original>
// kernel: tile.9
$region0: #{tile.9}
  %s0 = inlined_call_operand.vmem [shape: f32[2,24], index: 0, kind: input, shape index: {}]
  %s1 = inlined_call_operand.vmem [shape: f32[1,48], index: 1, kind: output, shape index: {}]
  $region1: #{tile.9} parent=0
    #allocation0 [shape = 'u8[4096]{0}', space=vmem, size = 0x1000, scoped, tag = 'scoped mem for output reshape']
    #allocation1 [shape = 'u8[4096]{0}', space=vmem, size = 0x1000, scoped, tag = 'scoped mem for input reshape']
    %s3 = sshllo.u32 0, 2
    %v4 = vld [vmem:[%s0] sm:%s3]
    %5 = vst [vmem:[#allocation1] sm:%s3] %v4
    %v6 = vld [vmem:[#allocation1] sm:$0x1]
    %vm7 = vcmask 195584
    %8 = vst.msk [vmem:[#allocation0] sm:$0x1] %vm7, %v6
    %s9 = scalar_lea.vmem [#allocation1], 1
    %v10 = vld [vmem:[%s9] sm:$0x1]
    %11 = vrot.lane.b32.xlu0 %v10, 24
    %v12 = vpop.permute.xlu0 %11
    %vm13 = vcmask 392384
    %14 = vst.msk [vmem:[#allocation0] sm:$0x1] %vm13, %v12
    %s16 = sshllo.u32 0, 1
    %v18 = vld [vmem:[#allocation0] sm:%s16]
    %s19 = sshllo.u32 0, 1
    %20 = vst [vmem:[%s1] sm:%s19] %v18

// kernel: tile.8
$region0: #{tile.8}
  #allocation0 [shape = 's32[1]{0}', space=sflag, size = 0x4, scoped, tag = 'scoped memory for tile.8']
  %s0 = inlined_call_operand.vmem [shape: f32[24], index: 0, kind: input, shape index: {}]
  %s1 = inlined_call_operand.vmem [shape: f32[2,24], index: 1, kind: output, shape index: {}]
  // Predicated region
  $region2: #{tile.8} parent=0 // pred_check
    _
  $region3: #{tile.8} parent=0 // pred_check_branch
    %3 = sbr.rel (0) target = $region5
  $region4: #{tile.8} parent=0 // pred_region
    _
  $region5: #{tile.8} parent=0 // pred_fallthru
    _
  %v4 = vld [vmem:[%s0] ss:$0 sm:$0xff]
  %5 = vst [vmem:[%s1] sm:$0x3] %v4

// kernel: up_module_forward.1
$region0: #{up_module_forward.1}
  #allocation0 [shape = 'u32[]', space=smem, size = 0x4, offset = 0x4, fixed_abs, tag = 'smem constant byte address 0x4 - core index']
  #allocation1 [shape = 'u32[144,128]{1,0:T(1,128)}', space=vmem, size = 0x12000, scoped, tag = 'internal scratch']
  %s0 = inlined_call_operand.vmem [shape: f32[2,18,18,24], index: 0, kind: input, shape index: {}]
  %s1 = inlined_call_operand.vmem [shape: bf16[2,144,48], index: 1, kind: input, shape index: {}]
  %s2 = inlined_call_operand.vmem [shape: f32[1,48], index: 2, kind: input, shape index: {}]
  %s3 = inlined_call_operand.vmem [shape: f32[2,2,16,16,48], index: 3, kind: output, shape index: {}]
  %s4 = sld [smem:[#allocation0]]
  $region45: #{up_module_forward.1} parent=0
    _
  %s6 = ssub.s32 1, %s4
  %s7 = scalar_select 0, %s6, %s4
  loop: start=0, step=1, limit=4
  $region2: #{up_module_forward.1} parent=0 // loop_pre_header
    _
  $region3: #{up_module_forward.1} parent=0 // loop_header
    %s9 = sphi 0, %s13
    %p10 = scmp.ge.s32.totalorder %s9, 4
    %s16 = sphi 0, %s28
    %s17 = sphi 0, %s24
    %s18 = sphi 0, %s16
    %s19 = sphi 0, %s17
    %s20 = sphi 0, %s18
    %s21 = sphi 0, %s19
    %s31 = sphi 0, %s33
    %s34 = sphi 0, %s31
    %s35 = sphi 0, %s34
    %s51 = sphi 0, %s35
    %s55 = sphi 0, %s55
    %s57 = sphi 0, %s55
    %s58 = sphi 0, %s57
    %s72 = sphi 0, %s58
    %s76 = sphi 0, %s76
    %s78 = sphi 0, %s76
    %s79 = sphi 0, %s78
    %s93 = sphi 0, %s79
    %s101 = sphi 0, %s103
    %s104 = sphi 0, %s101
    %s105 = sphi 0, %s104
    %s121 = sphi 0, %s105
  $region4: #{up_module_forward.1} parent=0 // loop_header_branch
    %12 = sbr.rel (%p10) target = $region8
  $region5: #{up_module_forward.1} parent=0 // loop_body
    %s14 = ssub.s32 %s9, 1
    %s15 = ssub.s32 %s9, 2
    %s22 = sadd.s32 1, %s17
    %p23 = scmp.ge.s32.totalorder %s22, 1
    %s24 = scalar_select %p23, 0, %s22
    %s25 = sadd.s32 1, %s16
    %s26 = scalar_select %p23, %s25, %s16
    %p27 = scmp.ge.s32.totalorder %s26, 2
    %s28 = scalar_select %p27, 0, %s26
    %s29 = ssub.s32 %s16, %s28
    %p30 = scmp.eq.s32.totalorder %s29, 0
    %s32 = sadd.s32 %s31, 1
    %s33 = scalar_select %p30, %s31, %s32
    %p36 = pneg %p30
    %p37 = scmp.eq.s32.totalorder %s9, 1
    %p38 = por %p36, %p37
    %p39 = scmp.ne.s32.totalorder %s31, %s34
    %p40 = scmp.eq.s32.totalorder %s9, 0
    %p41 = por %p39, %p40
    %p42 = scmp.ne.s32.totalorder %s31, %s34
    %p43 = scmp.eq.s32.totalorder %s14, 1
    %p44 = por %p42, %p43
    %p45 = scmp.ne.s32.totalorder %s34, %s35
    %p46 = scmp.eq.s32.totalorder %s14, 0
    %p47 = por %p45, %p46
    %p48 = scmp.ne.s32.totalorder %s34, %s35
    %p49 = scmp.eq.s32.totalorder %s15, 1
    %p50 = por %p48, %p49
    %p52 = scmp.ne.s32.totalorder %s35, %s51
    %p53 = scmp.eq.s32.totalorder %s15, 0
    %p54 = por %p52, %p53
    %s56 = sadd.s32 %s55, 1
    %p59 = scmp.eq.s32.totalorder %s9, 1
    %p60 = scmp.ne.s32.totalorder %s55, %s57
    %p61 = scmp.eq.s32.totalorder %s9, 0
    %p62 = por %p60, %p61
    %p63 = scmp.ne.s32.totalorder %s55, %s57
    %p64 = scmp.eq.s32.totalorder %s14, 1
    %p65 = por %p63, %p64
    %p66 = scmp.ne.s32.totalorder %s57, %s58
    %p67 = scmp.eq.s32.totalorder %s14, 0
    %p68 = por %p66, %p67
    %p69 = scmp.ne.s32.totalorder %s57, %s58
    %p70 = scmp.eq.s32.totalorder %s15, 1
    %p71 = por %p69, %p70
    %p73 = scmp.ne.s32.totalorder %s58, %s72
    %p74 = scmp.eq.s32.totalorder %s15, 0
    %p75 = por %p73, %p74
    %s77 = sadd.s32 %s76, 1
    %p80 = scmp.eq.s32.totalorder %s9, 1
    %p81 = scmp.ne.s32.totalorder %s76, %s78
    %p82 = scmp.eq.s32.totalorder %s9, 0
    %p83 = por %p81, %p82
    %p84 = scmp.ne.s32.totalorder %s76, %s78
    %p85 = scmp.eq.s32.totalorder %s14, 1
    %p86 = por %p84, %p85
    %p87 = scmp.ne.s32.totalorder %s78, %s79
    %p88 = scmp.eq.s32.totalorder %s14, 0
    %p89 = por %p87, %p88
    %p90 = scmp.ne.s32.totalorder %s78, %s79
    %p91 = scmp.eq.s32.totalorder %s15, 1
    %p92 = por %p90, %p91
    %p94 = scmp.ne.s32.totalorder %s79, %s93
    %p95 = scmp.eq.s32.totalorder %s15, 0
    %p96 = por %p94, %p95
    %s97 = ssub.s32 %s16, %s28
    %s98 = ssub.s32 %s17, %s24
    %s99 = sor.u32 %s97, %s98
    %p100 = scmp.eq.s32.totalorder %s99, 0
    %s102 = sadd.s32 %s101, 1
    %s103 = scalar_select %p100, %s101, %s102
    %p106 = pneg %p100
    %p107 = scmp.eq.s32.totalorder %s9, 1
    %p108 = por %p106, %p107
    %p109 = scmp.ne.s32.totalorder %s101, %s104
    %p110 = scmp.eq.s32.totalorder %s9, 0
    %p111 = por %p109, %p110
    %p112 = scmp.ne.s32.totalorder %s101, %s104
    %p113 = scmp.eq.s32.totalorder %s14, 1
    %p114 = por %p112, %p113
    %p115 = scmp.ne.s32.totalorder %s104, %s105
    %p116 = scmp.eq.s32.totalorder %s14, 0
    %p117 = por %p115, %p116
    %p118 = scmp.ne.s32.totalorder %s104, %s105
    %p119 = scmp.eq.s32.totalorder %s15, 1
    %p120 = por %p118, %p119
    %p122 = scmp.ne.s32.totalorder %s105, %s121
    %p123 = scmp.eq.s32.totalorder %s15, 0
    %p124 = por %p122, %p123
    %p125 = scmp.le.s32.totalorder 1, %s9
    %p126 = scmp.lt.s32.totalorder %s9, 3
    %p127 = pnand %p125, %p126
    %p128 = pneg %p127
    // Predicated region
    $region9: #{up_module_forward.1} parent=5 // pred_check
      _
    $region10: #{up_module_forward.1} parent=5 // pred_check_branch
      %130 = sbr.rel (%p127) target = $region12
    $region11: #{up_module_forward.1} parent=5 // pred_region
      %s131 = ssub.s32 %s9, 1
      // Predicated region
      $region13: #{up_module_forward.1} parent=11 // pred_check
        %p132 = pneg %p68
      $region14: #{up_module_forward.1} parent=11 // pred_check_branch
        %134 = sbr.rel (%p132) target = $region16
      $region15: #{up_module_forward.1} parent=11 // pred_region
        _
      $region16: #{up_module_forward.1} parent=11 // pred_fallthru
        _
      // Predicated region
      $region17: #{up_module_forward.1} parent=11 // pred_check
        %p135 = pneg %p89
      $region18: #{up_module_forward.1} parent=11 // pred_check_branch
        %137 = sbr.rel (%p135) target = $region20
      $region19: #{up_module_forward.1} parent=11 // pred_region
        _
      $region20: #{up_module_forward.1} parent=11 // pred_fallthru
        _
    $region12: #{up_module_forward.1} parent=5 // pred_fallthru
      _
    %p138 = scmp.lt.s32.totalorder %s9, 2
    // Predicated region
    $region21: #{up_module_forward.1} parent=5 // pred_check
      %p139 = pneg %p138
    $region22: #{up_module_forward.1} parent=5 // pred_check_branch
      %141 = sbr.rel (%p139) target = $region24
    $region23: #{up_module_forward.1} parent=5 // pred_region
      // Predicated region
      $region25: #{up_module_forward.1} parent=23 // pred_check
        %p142 = pneg %p41
      $region26: #{up_module_forward.1} parent=23 // pred_check_branch
        %144 = sbr.rel (%p142) target = $region28
      $region27: #{up_module_forward.1} parent=23 // pred_region
        %p145 = scmp.lt.s32.totalorder %s16, 1
        %s146 = scalar_select %p145, %s16, 1
        %s147 = smul.addr %s146, 54
        %s148 = smul.addr %s147, 8
        %s149 = scalar_lea.vmem %s0, %s148
      $region28: #{up_module_forward.1} parent=23 // pred_fallthru
        _
    $region24: #{up_module_forward.1} parent=5 // pred_fallthru
      _
    %p150 = scmp.le.s32.totalorder 1, %s9
    %p151 = scmp.lt.s32.totalorder %s9, 3
    %p152 = pnand %p150, %p151
    %p153 = pneg %p152
    // Predicated region
    $region29: #{up_module_forward.1} parent=5 // pred_check
      _
    $region30: #{up_module_forward.1} parent=5 // pred_check_branch
      %155 = sbr.rel (%p152) target = $region32
    $region31: #{up_module_forward.1} parent=5 // pred_region
      %s156 = ssub.s32 %s9, 1
      %p157 = scmp.lt.s32.totalorder %s18, 1
      %s158 = scalar_select %p157, %s18, 1
      %s159 = smul.addr %s158, 54
      %s160 = smul.addr %s159, 8
      %s161 = scalar_lea.vmem %s0, %s160
      %p162 = pneg %p47
      %p163 = pneg %p44
      %p164 = pneg %p68
      %p165 = pneg %p65
      %p166 = pneg %p89
      %p167 = pneg %p86
      %p168 = pneg %p117
      %p169 = pneg %p114
      %s170 = smul.u32 16, %s19
      %p171 = scmp.lt.s32.totalorder %s18, 1
      %s172 = scalar_select %p171, %s18, 1
      %p173 = scmp.lt.s32.totalorder %s170, 15
      %s174 = scalar_select %p173, %s170, 15
      %s175 = smul.addr %s174, 2
      %s176 = smul.addr %s172, 64
      %s177 = sadd.s32 %s175, %s176
      %s178 = smul.addr %s177, 8
      %s179 = scalar_lea.vmem %s3, %s178
      %p180 = scmp.lt.s32.totalorder %s18, 1
      %s181 = scalar_select %p180, %s18, 1
      %s182 = smul.addr %s181, 54
      %s183 = smul.addr %s182, 8
      %s184 = scalar_lea.vmem %s0, %s183
      %s185 = smul.u32 16, %s19
      %p186 = scmp.lt.s32.totalorder %s18, 1
      %s187 = scalar_select %p186, %s18, 1
      %p188 = scmp.lt.s32.totalorder %s185, 15
      %s189 = scalar_select %p188, %s185, 15
      %s190 = smul.addr %s189, 2
      %s191 = smul.addr %s187, 64
      %s192 = sadd.s32 %s190, %s191
      %s193 = smul.addr %s192, 8
      %s194 = scalar_lea.vmem %s3, %s193
      %s195 = smul.u32 16, %s19
      %s197 = smul.u32 %s19, 16
      %s198 = smul.u32 %s197, 24
      %s199 = scalar_lea.vmem %s184, %s198
      %v200 = vld [vmem:[%s199] sm:$0xff]
      %v201 = vld [vmem:[%s199 + $0x8] sm:$0xff]
      %v202 = vld [vmem:[%s199 + $0x10] sm:$0x3]
      %v203 = vld [vmem:[%s199 + $0x18] sm:$0xff]
      %v204 = vld [vmem:[%s199 + $0x20] sm:$0xff]
      %v205 = vld [vmem:[%s199 + $0x28] sm:$0x3]
      %v206 = vld [vmem:[%s199 + $0x30] sm:$0xff]
      %v207 = vld [vmem:[%s199 + $0x38] sm:$0xff]
      %v208 = vld [vmem:[%s199 + $0x40] sm:$0x3]
      %v209 = vld [vmem:[%s199 + $0x48] sm:$0xff]
      %v210 = vld [vmem:[%s199 + $0x50] sm:$0xff]
      %v211 = vld [vmem:[%s199 + $0x58] sm:$0x3]
      %v212 = vld [vmem:[%s199 + $0x60] sm:$0xff]
      %v213 = vld [vmem:[%s199 + $0x68] sm:$0xff]
      %v214 = vld [vmem:[%s199 + $0x70] sm:$0x3]
      %v215 = vld [vmem:[%s199 + $0x78] sm:$0xff]
      %v216 = vld [vmem:[%s199 + $0x80] sm:$0xff]
      %v217 = vld [vmem:[%s199 + $0x88] sm:$0x3]
      %v218 = vld [vmem:[%s199 + $0x90] sm:$0xff]
      %v219 = vld [vmem:[%s199 + $0x98] sm:$0xff]
      %v220 = vld [vmem:[%s199 + $0xa0] sm:$0x3]
      %v221 = vld [vmem:[%s199 + $0xa8] sm:$0xff]
      %v222 = vld [vmem:[%s199 + $0xb0] sm:$0xff]
      %v223 = vld [vmem:[%s199 + $0xb8] sm:$0x3]
      %v224 = vld [vmem:[%s199 + $0xc0] sm:$0xff]
      %v225 = vld [vmem:[%s199 + $0xc8] sm:$0xff]
      %v226 = vld [vmem:[%s199 + $0xd0] sm:$0x3]
      %v227 = vld [vmem:[%s199 + $0xd8] sm:$0xff]
      %v228 = vld [vmem:[%s199 + $0xe0] sm:$0xff]
      %v229 = vld [vmem:[%s199 + $0xe8] sm:$0x3]
      %v230 = vld [vmem:[%s199 + $0xf0] sm:$0xff]
      %v231 = vld [vmem:[%s199 + $0xf8] sm:$0xff]
      %v232 = vld [vmem:[%s199 + $0x100] sm:$0x3]
      %v233 = vld [vmem:[%s199 + $0x108] sm:$0xff]
      %v234 = vld [vmem:[%s199 + $0x110] sm:$0xff]
      %v235 = vld [vmem:[%s199 + $0x118] sm:$0x3]
      %v236 = vld [vmem:[%s199 + $0x120] sm:$0xff]
      %v237 = vld [vmem:[%s199 + $0x128] sm:$0xff]
      %v238 = vld [vmem:[%s199 + $0x130] sm:$0x3]
      %v239 = vld [vmem:[%s199 + $0x138] sm:$0xff]
      %v240 = vld [vmem:[%s199 + $0x140] sm:$0xff]
      %v241 = vld [vmem:[%s199 + $0x148] sm:$0x3]
      %v242 = vld [vmem:[%s199 + $0x150] sm:$0xff]
      %v243 = vld [vmem:[%s199 + $0x158] sm:$0xff]
      %v244 = vld [vmem:[%s199 + $0x160] sm:$0x3]
      %v245 = vld [vmem:[%s199 + $0x168] sm:$0xff]
      %v246 = vld [vmem:[%s199 + $0x170] sm:$0xff]
      %v247 = vld [vmem:[%s199 + $0x178] sm:$0x3]
      %v248 = vld [vmem:[%s199 + $0x180] sm:$0xff]
      %v249 = vld [vmem:[%s199 + $0x188] sm:$0xff]
      %v250 = vld [vmem:[%s199 + $0x190] sm:$0x3]
      %v251 = vld [vmem:[%s199 + $0x198] sm:$0xff]
      %v252 = vld [vmem:[%s199 + $0x1a0] sm:$0xff]
      %v253 = vld [vmem:[%s199 + $0x1a8] sm:$0x3]
      %vm302 = vcmask 1046528
      %v303 = vrot.slane %v200, 1
      %v304 = vrot.slane %v201, 1
      %v305 = vsel %vm302, %v303, %v304
      %v306 = vrot.slane %v202, 1
      %v307 = vsel %vm302, %v304, %v306
      %v308 = vrot.slane %v203, 1
      %v309 = vrot.slane %v204, 1
      %v310 = vsel %vm302, %v308, %v309
      %v311 = vrot.slane %v205, 1
      %v312 = vsel %vm302, %v309, %v311
      %v313 = vrot.slane %v206, 1
      %v314 = vrot.slane %v207, 1
      %v315 = vsel %vm302, %v313, %v314
      %v316 = vrot.slane %v208, 1
      %v317 = vsel %vm302, %v314, %v316
      %v318 = vrot.slane %v209, 1
      %v319 = vrot.slane %v210, 1
      %v320 = vsel %vm302, %v318, %v319
      %v321 = vrot.slane %v211, 1
      %v322 = vsel %vm302, %v319, %v321
      %v323 = vrot.slane %v212, 1
      %v324 = vrot.slane %v213, 1
      %v325 = vsel %vm302, %v323, %v324
      %v326 = vrot.slane %v214, 1
      %v327 = vsel %vm302, %v324, %v326
      %v328 = vrot.slane %v215, 1
      %v329 = vrot.slane %v216, 1
      %v330 = vsel %vm302, %v328, %v329
      %v331 = vrot.slane %v217, 1
      %v332 = vsel %vm302, %v329, %v331
      %v333 = vrot.slane %v218, 1
      %v334 = vrot.slane %v219, 1
      %v335 = vsel %vm302, %v333, %v334
      %v336 = vrot.slane %v220, 1
      %v337 = vsel %vm302, %v334, %v336
      %v338 = vrot.slane %v221, 1
      %v339 = vrot.slane %v222, 1
      %v340 = vsel %vm302, %v338, %v339
      %v341 = vrot.slane %v223, 1
      %v342 = vsel %vm302, %v339, %v341
      %v343 = vrot.slane %v224, 1
      %v344 = vrot.slane %v225, 1
      %v345 = vsel %vm302, %v343, %v344
      %v346 = vrot.slane %v226, 1
      %v347 = vsel %vm302, %v344, %v346
      %v348 = vrot.slane %v227, 1
      %v349 = vrot.slane %v228, 1
      %v350 = vsel %vm302, %v348, %v349
      %v351 = vrot.slane %v229, 1
      %v352 = vsel %vm302, %v349, %v351
      %v353 = vrot.slane %v230, 1
      %v354 = vrot.slane %v231, 1
      %v355 = vsel %vm302, %v353, %v354
      %v356 = vrot.slane %v232, 1
      %v357 = vsel %vm302, %v354, %v356
      %v358 = vrot.slane %v233, 1
      %v359 = vrot.slane %v234, 1
      %v360 = vsel %vm302, %v358, %v359
      %v361 = vrot.slane %v235, 1
      %v362 = vsel %vm302, %v359, %v361
      %v363 = vrot.slane %v236, 1
      %v364 = vrot.slane %v237, 1
      %v365 = vsel %vm302, %v363, %v364
      %v366 = vrot.slane %v238, 1
      %v367 = vsel %vm302, %v364, %v366
      %v368 = vrot.slane %v239, 1
      %v369 = vrot.slane %v240, 1
      %v370 = vsel %vm302, %v368, %v369
      %v371 = vrot.slane %v241, 1
      %v372 = vsel %vm302, %v369, %v371
      %v373 = vrot.slane %v242, 1
      %v374 = vrot.slane %v243, 1
      %v375 = vsel %vm302, %v373, %v374
      %v376 = vrot.slane %v244, 1
      %v377 = vsel %vm302, %v374, %v376
      %v378 = vrot.slane %v245, 1
      %v379 = vrot.slane %v246, 1
      %v380 = vsel %vm302, %v378, %v379
      %v381 = vrot.slane %v247, 1
      %v382 = vsel %vm302, %v379, %v381
      %383 = vrot.lane.b32.xlu0 %v305, 24
      %v384 = vpop.permute.xlu0 %383
      %385 = vrot.lane.b32.xlu0 %v307, 24
      %v386 = vpop.permute.xlu0 %385
      %387 = vrot.lane.b32.xlu0 %v310, 24
      %v388 = vpop.permute.xlu0 %387
      %389 = vrot.lane.b32.xlu0 %v312, 24
      %v390 = vpop.permute.xlu0 %389
      %391 = vrot.lane.b32.xlu0 %v315, 24
      %v392 = vpop.permute.xlu0 %391
      %393 = vrot.lane.b32.xlu0 %v317, 24
      %v394 = vpop.permute.xlu0 %393
      %395 = vrot.lane.b32.xlu0 %v320, 24
      %v396 = vpop.permute.xlu0 %395
      %397 = vrot.lane.b32.xlu0 %v322, 24
      %v398 = vpop.permute.xlu0 %397
      %399 = vrot.lane.b32.xlu0 %v325, 24
      %v400 = vpop.permute.xlu0 %399
      %401 = vrot.lane.b32.xlu0 %v327, 24
      %v402 = vpop.permute.xlu0 %401
      %403 = vrot.lane.b32.xlu0 %v330, 24
      %v404 = vpop.permute.xlu0 %403
      %405 = vrot.lane.b32.xlu0 %v332, 24
      %v406 = vpop.permute.xlu0 %405
      %407 = vrot.lane.b32.xlu0 %v335, 24
      %v408 = vpop.permute.xlu0 %407
      %409 = vrot.lane.b32.xlu0 %v337, 24
      %v410 = vpop.permute.xlu0 %409
      %411 = vrot.lane.b32.xlu0 %v340, 24
      %v412 = vpop.permute.xlu0 %411
      %413 = vrot.lane.b32.xlu0 %v342, 24
      %v414 = vpop.permute.xlu0 %413
      %415 = vrot.lane.b32.xlu0 %v345, 24
      %v416 = vpop.permute.xlu0 %415
      %417 = vrot.lane.b32.xlu0 %v347, 24
      %v418 = vpop.permute.xlu0 %417
      %419 = vrot.lane.b32.xlu0 %v350, 24
      %v420 = vpop.permute.xlu0 %419
      %421 = vrot.lane.b32.xlu0 %v352, 24
      %v422 = vpop.permute.xlu0 %421
      %423 = vrot.lane.b32.xlu0 %v355, 24
      %v424 = vpop.permute.xlu0 %423
      %425 = vrot.lane.b32.xlu0 %v357, 24
      %v426 = vpop.permute.xlu0 %425
      %427 = vrot.lane.b32.xlu0 %v360, 24
      %v428 = vpop.permute.xlu0 %427
      %429 = vrot.lane.b32.xlu0 %v362, 24
      %v430 = vpop.permute.xlu0 %429
      %431 = vrot.lane.b32.xlu0 %v365, 24
      %v432 = vpop.permute.xlu0 %431
      %433 = vrot.lane.b32.xlu0 %v367, 24
      %v434 = vpop.permute.xlu0 %433
      %435 = vrot.lane.b32.xlu0 %v370, 24
      %v436 = vpop.permute.xlu0 %435
      %437 = vrot.lane.b32.xlu0 %v372, 24
      %v438 = vpop.permute.xlu0 %437
      %439 = vrot.lane.b32.xlu0 %v375, 24
      %v440 = vpop.permute.xlu0 %439
      %441 = vrot.lane.b32.xlu0 %v377, 24
      %v442 = vpop.permute.xlu0 %441
      %443 = vrot.lane.b32.xlu0 %v380, 24
      %v444 = vpop.permute.xlu0 %443
      %445 = vrot.lane.b32.xlu0 %v382, 24
      %v446 = vpop.permute.xlu0 %445
      %vm479 = vcmask 1045504
      %v480 = vrot.slane %v200, 2
      %v481 = vrot.slane %v201, 2
      %v482 = vsel %vm479, %v480, %v481
      %v483 = vrot.slane %v202, 2
      %v484 = vsel %vm479, %v481, %v483
      %v485 = vrot.slane %v203, 2
      %v486 = vrot.slane %v204, 2
      %v487 = vsel %vm479, %v485, %v486
      %v488 = vrot.slane %v205, 2
      %v489 = vsel %vm479, %v486, %v488
      %v490 = vrot.slane %v206, 2
      %v491 = vrot.slane %v207, 2
      %v492 = vsel %vm479, %v490, %v491
      %v493 = vrot.slane %v208, 2
      %v494 = vsel %vm479, %v491, %v493
      %v495 = vrot.slane %v209, 2
      %v496 = vrot.slane %v210, 2
      %v497 = vsel %vm479, %v495, %v496
      %v498 = vrot.slane %v211, 2
      %v499 = vsel %vm479, %v496, %v498
      %v500 = vrot.slane %v212, 2
      %v501 = vrot.slane %v213, 2
      %v502 = vsel %vm479, %v500, %v501
      %v503 = vrot.slane %v214, 2
      %v504 = vsel %vm479, %v501, %v503
      %v505 = vrot.slane %v215, 2
      %v506 = vrot.slane %v216, 2
      %v507 = vsel %vm479, %v505, %v506
      %v508 = vrot.slane %v217, 2
      %v509 = vsel %vm479, %v506, %v508
      %v510 = vrot.slane %v218, 2
      %v511 = vrot.slane %v219, 2
      %v512 = vsel %vm479, %v510, %v511
      %v513 = vrot.slane %v220, 2
      %v514 = vsel %vm479, %v511, %v513
      %v515 = vrot.slane %v221, 2
      %v516 = vrot.slane %v222, 2
      %v517 = vsel %vm479, %v515, %v516
      %v518 = vrot.slane %v223, 2
      %v519 = vsel %vm479, %v516, %v518
      %v520 = vrot.slane %v224, 2
      %v521 = vrot.slane %v225, 2
      %v522 = vsel %vm479, %v520, %v521
      %v523 = vrot.slane %v226, 2
      %v524 = vsel %vm479, %v521, %v523
      %v525 = vrot.slane %v227, 2
      %v526 = vrot.slane %v228, 2
      %v527 = vsel %vm479, %v525, %v526
      %v528 = vrot.slane %v229, 2
      %v529 = vsel %vm479, %v526, %v528
      %v530 = vrot.slane %v230, 2
      %v531 = vrot.slane %v231, 2
      %v532 = vsel %vm479, %v530, %v531
      %v533 = vrot.slane %v232, 2
      %v534 = vsel %vm479, %v531, %v533
      %v535 = vrot.slane %v233, 2
      %v536 = vrot.slane %v234, 2
      %v537 = vsel %vm479, %v535, %v536
      %v538 = vrot.slane %v235, 2
      %v539 = vsel %vm479, %v536, %v538
      %v540 = vrot.slane %v236, 2
      %v541 = vrot.slane %v237, 2
      %v542 = vsel %vm479, %v540, %v541
      %v543 = vrot.slane %v238, 2
      %v544 = vsel %vm479, %v541, %v543
      %v545 = vrot.slane %v239, 2
      %v546 = vrot.slane %v240, 2
      %v547 = vsel %vm479, %v545, %v546
      %v548 = vrot.slane %v241, 2
      %v549 = vsel %vm479, %v546, %v548
      %v550 = vrot.slane %v242, 2
      %v551 = vrot.slane %v243, 2
      %v552 = vsel %vm479, %v550, %v551
      %v553 = vrot.slane %v244, 2
      %v554 = vsel %vm479, %v551, %v553
      %v555 = vrot.slane %v245, 2
      %v556 = vrot.slane %v246, 2
      %v557 = vsel %vm479, %v555, %v556
      %v558 = vrot.slane %v247, 2
      %v559 = vsel %vm479, %v556, %v558
      %560 = vrot.lane.b32.xlu0 %v482, 48
      %v561 = vpop.permute.xlu0 %560
      %562 = vrot.lane.b32.xlu0 %v484, 48
      %v563 = vpop.permute.xlu0 %562
      %564 = vrot.lane.b32.xlu0 %v487, 48
      %v565 = vpop.permute.xlu0 %564
      %566 = vrot.lane.b32.xlu0 %v489, 48
      %v567 = vpop.permute.xlu0 %566
      %568 = vrot.lane.b32.xlu0 %v492, 48
      %v569 = vpop.permute.xlu0 %568
      %570 = vrot.lane.b32.xlu0 %v494, 48
      %v571 = vpop.permute.xlu0 %570
      %572 = vrot.lane.b32.xlu0 %v497, 48
      %v573 = vpop.permute.xlu0 %572
      %574 = vrot.lane.b32.xlu0 %v499, 48
      %v575 = vpop.permute.xlu0 %574
      %576 = vrot.lane.b32.xlu0 %v502, 48
      %v577 = vpop.permute.xlu0 %576
      %578 = vrot.lane.b32.xlu0 %v504, 48
      %v579 = vpop.permute.xlu0 %578
      %580 = vrot.lane.b32.xlu0 %v507, 48
      %v581 = vpop.permute.xlu0 %580
      %582 = vrot.lane.b32.xlu0 %v509, 48
      %v583 = vpop.permute.xlu0 %582
      %584 = vrot.lane.b32.xlu0 %v512, 48
      %v585 = vpop.permute.xlu0 %584
      %586 = vrot.lane.b32.xlu0 %v514, 48
      %v587 = vpop.permute.xlu0 %586
      %588 = vrot.lane.b32.xlu0 %v517, 48
      %v589 = vpop.permute.xlu0 %588
      %590 = vrot.lane.b32.xlu0 %v519, 48
      %v591 = vpop.permute.xlu0 %590
      %592 = vrot.lane.b32.xlu0 %v522, 48
      %v593 = vpop.permute.xlu0 %592
      %594 = vrot.lane.b32.xlu0 %v524, 48
      %v595 = vpop.permute.xlu0 %594
      %596 = vrot.lane.b32.xlu0 %v527, 48
      %v597 = vpop.permute.xlu0 %596
      %598 = vrot.lane.b32.xlu0 %v529, 48
      %v599 = vpop.permute.xlu0 %598
      %600 = vrot.lane.b32.xlu0 %v532, 48
      %v601 = vpop.permute.xlu0 %600
      %602 = vrot.lane.b32.xlu0 %v534, 48
      %v603 = vpop.permute.xlu0 %602
      %604 = vrot.lane.b32.xlu0 %v537, 48
      %v605 = vpop.permute.xlu0 %604
      %606 = vrot.lane.b32.xlu0 %v539, 48
      %v607 = vpop.permute.xlu0 %606
      %608 = vrot.lane.b32.xlu0 %v542, 48
      %v609 = vpop.permute.xlu0 %608
      %610 = vrot.lane.b32.xlu0 %v544, 48
      %v611 = vpop.permute.xlu0 %610
      %612 = vrot.lane.b32.xlu0 %v547, 48
      %v613 = vpop.permute.xlu0 %612
      %614 = vrot.lane.b32.xlu0 %v549, 48
      %v615 = vpop.permute.xlu0 %614
      %616 = vrot.lane.b32.xlu0 %v552, 48
      %v617 = vpop.permute.xlu0 %616
      %618 = vrot.lane.b32.xlu0 %v554, 48
      %v619 = vpop.permute.xlu0 %618
      %620 = vrot.lane.b32.xlu0 %v557, 48
      %v621 = vpop.permute.xlu0 %620
      %622 = vrot.lane.b32.xlu0 %v559, 48
      %v623 = vpop.permute.xlu0 %622
      %658 = vrot.lane.b32.xlu0 %v203, 72
      %v659 = vpop.permute.xlu0 %658
      %660 = vrot.lane.b32.xlu0 %v204, 72
      %v661 = vpop.permute.xlu0 %660
      %662 = vrot.lane.b32.xlu0 %v206, 72
      %v663 = vpop.permute.xlu0 %662
      %664 = vrot.lane.b32.xlu0 %v207, 72
      %v665 = vpop.permute.xlu0 %664
      %666 = vrot.lane.b32.xlu0 %v209, 72
      %v667 = vpop.permute.xlu0 %666
      %668 = vrot.lane.b32.xlu0 %v210, 72
      %v669 = vpop.permute.xlu0 %668
      %670 = vrot.lane.b32.xlu0 %v212, 72
      %v671 = vpop.permute.xlu0 %670
      %672 = vrot.lane.b32.xlu0 %v213, 72
      %v673 = vpop.permute.xlu0 %672
      %674 = vrot.lane.b32.xlu0 %v215, 72
      %v675 = vpop.permute.xlu0 %674
      %676 = vrot.lane.b32.xlu0 %v216, 72
      %v677 = vpop.permute.xlu0 %676
      %678 = vrot.lane.b32.xlu0 %v218, 72
      %v679 = vpop.permute.xlu0 %678
      %680 = vrot.lane.b32.xlu0 %v219, 72
      %v681 = vpop.permute.xlu0 %680
      %682 = vrot.lane.b32.xlu0 %v221, 72
      %v683 = vpop.permute.xlu0 %682
      %684 = vrot.lane.b32.xlu0 %v222, 72
      %v685 = vpop.permute.xlu0 %684
      %686 = vrot.lane.b32.xlu0 %v224, 72
      %v687 = vpop.permute.xlu0 %686
      %688 = vrot.lane.b32.xlu0 %v225, 72
      %v689 = vpop.permute.xlu0 %688
      %690 = vrot.lane.b32.xlu0 %v227, 72
      %v691 = vpop.permute.xlu0 %690
      %692 = vrot.lane.b32.xlu0 %v228, 72
      %v693 = vpop.permute.xlu0 %692
      %694 = vrot.lane.b32.xlu0 %v230, 72
      %v695 = vpop.permute.xlu0 %694
      %696 = vrot.lane.b32.xlu0 %v231, 72
      %v697 = vpop.permute.xlu0 %696
      %698 = vrot.lane.b32.xlu0 %v233, 72
      %v699 = vpop.permute.xlu0 %698
      %700 = vrot.lane.b32.xlu0 %v234, 72
      %v701 = vpop.permute.xlu0 %700
      %702 = vrot.lane.b32.xlu0 %v236, 72
      %v703 = vpop.permute.xlu0 %702
      %704 = vrot.lane.b32.xlu0 %v237, 72
      %v705 = vpop.permute.xlu0 %704
      %706 = vrot.lane.b32.xlu0 %v239, 72
      %v707 = vpop.permute.xlu0 %706
      %708 = vrot.lane.b32.xlu0 %v240, 72
      %v709 = vpop.permute.xlu0 %708
      %710 = vrot.lane.b32.xlu0 %v242, 72
      %v711 = vpop.permute.xlu0 %710
      %712 = vrot.lane.b32.xlu0 %v243, 72
      %v713 = vpop.permute.xlu0 %712
      %714 = vrot.lane.b32.xlu0 %v245, 72
      %v715 = vpop.permute.xlu0 %714
      %716 = vrot.lane.b32.xlu0 %v246, 72
      %v717 = vpop.permute.xlu0 %716
      %718 = vrot.lane.b32.xlu0 %v248, 72
      %v719 = vpop.permute.xlu0 %718
      %720 = vrot.lane.b32.xlu0 %v249, 72
      %v721 = vpop.permute.xlu0 %720
      %v755 = vrot.slane %v248, 1
      %v756 = vrot.slane %v249, 1
      %v757 = vsel %vm302, %v755, %v756
      %v758 = vrot.slane %v250, 1
      %v759 = vsel %vm302, %v756, %v758
      %760 = vrot.lane.b32.xlu0 %v310, 96
      %v761 = vpop.permute.xlu0 %760
      %762 = vrot.lane.b32.xlu0 %v312, 96
      %v763 = vpop.permute.xlu0 %762
      %764 = vrot.lane.b32.xlu0 %v315, 96
      %v765 = vpop.permute.xlu0 %764
      %766 = vrot.lane.b32.xlu0 %v317, 96
      %v767 = vpop.permute.xlu0 %766
      %768 = vrot.lane.b32.xlu0 %v320, 96
      %v769 = vpop.permute.xlu0 %768
      %770 = vrot.lane.b32.xlu0 %v322, 96
      %v771 = vpop.permute.xlu0 %770
      %772 = vrot.lane.b32.xlu0 %v325, 96
      %v773 = vpop.permute.xlu0 %772
      %774 = vrot.lane.b32.xlu0 %v327, 96
      %v775 = vpop.permute.xlu0 %774
      %776 = vrot.lane.b32.xlu0 %v330, 96
      %v777 = vpop.permute.xlu0 %776
      %778 = vrot.lane.b32.xlu0 %v332, 96
      %v779 = vpop.permute.xlu0 %778
      %780 = vrot.lane.b32.xlu0 %v335, 96
      %v781 = vpop.permute.xlu0 %780
      %782 = vrot.lane.b32.xlu0 %v337, 96
      %v783 = vpop.permute.xlu0 %782
      %784 = vrot.lane.b32.xlu0 %v340, 96
      %v785 = vpop.permute.xlu0 %784
      %786 = vrot.lane.b32.xlu0 %v342, 96
      %v787 = vpop.permute.xlu0 %786
      %788 = vrot.lane.b32.xlu0 %v345, 96
      %v789 = vpop.permute.xlu0 %788
      %790 = vrot.lane.b32.xlu0 %v347, 96
      %v791 = vpop.permute.xlu0 %790
      %792 = vrot.lane.b32.xlu0 %v350, 96
      %v793 = vpop.permute.xlu0 %792
      %794 = vrot.lane.b32.xlu0 %v352, 96
      %v795 = vpop.permute.xlu0 %794
      %796 = vrot.lane.b32.xlu0 %v355, 96
      %v797 = vpop.permute.xlu0 %796
      %798 = vrot.lane.b32.xlu0 %v357, 96
      %v799 = vpop.permute.xlu0 %798
      %800 = vrot.lane.b32.xlu0 %v360, 96
      %v801 = vpop.permute.xlu0 %800
      %802 = vrot.lane.b32.xlu0 %v362, 96
      %v803 = vpop.permute.xlu0 %802
      %804 = vrot.lane.b32.xlu0 %v365, 96
      %v805 = vpop.permute.xlu0 %804
      %806 = vrot.lane.b32.xlu0 %v367, 96
      %v807 = vpop.permute.xlu0 %806
      %808 = vrot.lane.b32.xlu0 %v370, 96
      %v809 = vpop.permute.xlu0 %808
      %810 = vrot.lane.b32.xlu0 %v372, 96
      %v811 = vpop.permute.xlu0 %810
      %812 = vrot.lane.b32.xlu0 %v375, 96
      %v813 = vpop.permute.xlu0 %812
      %814 = vrot.lane.b32.xlu0 %v377, 96
      %v815 = vpop.permute.xlu0 %814
      %816 = vrot.lane.b32.xlu0 %v380, 96
      %v817 = vpop.permute.xlu0 %816
      %818 = vrot.lane.b32.xlu0 %v382, 96
      %v819 = vpop.permute.xlu0 %818
      %820 = vrot.lane.b32.xlu0 %v757, 96
      %v821 = vpop.permute.xlu0 %820
      %822 = vrot.lane.b32.xlu0 %v759, 96
      %v823 = vpop.permute.xlu0 %822
      %v856 = vrot.slane %v248, 2
      %v857 = vrot.slane %v249, 2
      %v858 = vsel %vm479, %v856, %v857
      %v859 = vrot.slane %v250, 2
      %v860 = vsel %vm479, %v857, %v859
      %861 = vrot.lane.b32.xlu0 %v487, 120
      %v862 = vpop.permute.xlu0 %861
      %863 = vrot.lane.b32.xlu0 %v489, 120
      %v864 = vpop.permute.xlu0 %863
      %865 = vrot.lane.b32.xlu0 %v492, 120
      %v866 = vpop.permute.xlu0 %865
      %867 = vrot.lane.b32.xlu0 %v494, 120
      %v868 = vpop.permute.xlu0 %867
      %869 = vrot.lane.b32.xlu0 %v497, 120
      %v870 = vpop.permute.xlu0 %869
      %871 = vrot.lane.b32.xlu0 %v499, 120
      %v872 = vpop.permute.xlu0 %871
      %873 = vrot.lane.b32.xlu0 %v502, 120
      %v874 = vpop.permute.xlu0 %873
      %875 = vrot.lane.b32.xlu0 %v504, 120
      %v876 = vpop.permute.xlu0 %875
      %877 = vrot.lane.b32.xlu0 %v507, 120
      %v878 = vpop.permute.xlu0 %877
      %879 = vrot.lane.b32.xlu0 %v509, 120
      %v880 = vpop.permute.xlu0 %879
      %881 = vrot.lane.b32.xlu0 %v512, 120
      %v882 = vpop.permute.xlu0 %881
      %883 = vrot.lane.b32.xlu0 %v514, 120
      %v884 = vpop.permute.xlu0 %883
      %885 = vrot.lane.b32.xlu0 %v517, 120
      %v886 = vpop.permute.xlu0 %885
      %887 = vrot.lane.b32.xlu0 %v519, 120
      %v888 = vpop.permute.xlu0 %887
      %889 = vrot.lane.b32.xlu0 %v522, 120
      %v890 = vpop.permute.xlu0 %889
      %891 = vrot.lane.b32.xlu0 %v524, 120
      %v892 = vpop.permute.xlu0 %891
      %893 = vrot.lane.b32.xlu0 %v527, 120
      %v894 = vpop.permute.xlu0 %893
      %895 = vrot.lane.b32.xlu0 %v529, 120
      %v896 = vpop.permute.xlu0 %895
      %897 = vrot.lane.b32.xlu0 %v532, 120
      %v898 = vpop.permute.xlu0 %897
      %899 = vrot.lane.b32.xlu0 %v534, 120
      %v900 = vpop.permute.xlu0 %899
      %901 = vrot.lane.b32.xlu0 %v537, 120
      %v902 = vpop.permute.xlu0 %901
      %903 = vrot.lane.b32.xlu0 %v539, 120
      %v904 = vpop.permute.xlu0 %903
      %905 = vrot.lane.b32.xlu0 %v542, 120
      %v906 = vpop.permute.xlu0 %905
      %907 = vrot.lane.b32.xlu0 %v544, 120
      %v908 = vpop.permute.xlu0 %907
      %909 = vrot.lane.b32.xlu0 %v547, 120
      %v910 = vpop.permute.xlu0 %909
      %911 = vrot.lane.b32.xlu0 %v549, 120
      %v912 = vpop.permute.xlu0 %911
      %913 = vrot.lane.b32.xlu0 %v552, 120
      %v914 = vpop.permute.xlu0 %913
      %915 = vrot.lane.b32.xlu0 %v554, 120
      %v916 = vpop.permute.xlu0 %915
      %917 = vrot.lane.b32.xlu0 %v557, 120
      %v918 = vpop.permute.xlu0 %917
      %919 = vrot.lane.b32.xlu0 %v559, 120
      %v920 = vpop.permute.xlu0 %919
      %921 = vrot.lane.b32.xlu0 %v858, 120
      %v922 = vpop.permute.xlu0 %921
      %923 = vrot.lane.b32.xlu0 %v860, 120
      %v924 = vpop.permute.xlu0 %923
      %vm957 = vcmask 195584
      %v958 = vsel %vm957, %v200, %v384
      %v959 = vsel %vm957, %v201, %v386
      %v960 = vsel %vm957, %v203, %v388
      %v961 = vsel %vm957, %v204, %v390
      %v962 = vsel %vm957, %v206, %v392
      %v963 = vsel %vm957, %v207, %v394
      %v964 = vsel %vm957, %v209, %v396
      %v965 = vsel %vm957, %v210, %v398
      %v966 = vsel %vm957, %v212, %v400
      %v967 = vsel %vm957, %v213, %v402
      %v968 = vsel %vm957, %v215, %v404
      %v969 = vsel %vm957, %v216, %v406
      %v970 = vsel %vm957, %v218, %v408
      %v971 = vsel %vm957, %v219, %v410
      %v972 = vsel %vm957, %v221, %v412
      %v973 = vsel %vm957, %v222, %v414
      %v974 = vsel %vm957, %v224, %v416
      %v975 = vsel %vm957, %v225, %v418
      %v976 = vsel %vm957, %v227, %v420
      %v977 = vsel %vm957, %v228, %v422
      %v978 = vsel %vm957, %v230, %v424
      %v979 = vsel %vm957, %v231, %v426
      %v980 = vsel %vm957, %v233, %v428
      %v981 = vsel %vm957, %v234, %v430
      %v982 = vsel %vm957, %v236, %v432
      %v983 = vsel %vm957, %v237, %v434
      %v984 = vsel %vm957, %v239, %v436
      %v985 = vsel %vm957, %v240, %v438
      %v986 = vsel %vm957, %v242, %v440
      %v987 = vsel %vm957, %v243, %v442
      %v988 = vsel %vm957, %v245, %v444
      %v989 = vsel %vm957, %v246, %v446
      %vm990 = vcmask 392192
      %v991 = vsel %vm990, %v958, %v561
      %v992 = vsel %vm990, %v959, %v563
      %v993 = vsel %vm990, %v960, %v565
      %v994 = vsel %vm990, %v961, %v567
      %v995 = vsel %vm990, %v962, %v569
      %v996 = vsel %vm990, %v963, %v571
      %v997 = vsel %vm990, %v964, %v573
      %v998 = vsel %vm990, %v965, %v575
      %v999 = vsel %vm990, %v966, %v577
      %v1000 = vsel %vm990, %v967, %v579
      %v1001 = vsel %vm990, %v968, %v581
      %v1002 = vsel %vm990, %v969, %v583
      %v1003 = vsel %vm990, %v970, %v585
      %v1004 = vsel %vm990, %v971, %v587
      %v1005 = vsel %vm990, %v972, %v589
      %v1006 = vsel %vm990, %v973, %v591
      %v1007 = vsel %vm990, %v974, %v593
      %v1008 = vsel %vm990, %v975, %v595
      %v1009 = vsel %vm990, %v976, %v597
      %v1010 = vsel %vm990, %v977, %v599
      %v1011 = vsel %vm990, %v978, %v601
      %v1012 = vsel %vm990, %v979, %v603
      %v1013 = vsel %vm990, %v980, %v605
      %v1014 = vsel %vm990, %v981, %v607
      %v1015 = vsel %vm990, %v982, %v609
      %v1016 = vsel %vm990, %v983, %v611
      %v1017 = vsel %vm990, %v984, %v613
      %v1018 = vsel %vm990, %v985, %v615
      %v1019 = vsel %vm990, %v986, %v617
      %v1020 = vsel %vm990, %v987, %v619
      %v1021 = vsel %vm990, %v988, %v621
      %v1022 = vsel %vm990, %v989, %v623
      %vm1023 = vcmask 588800
      %v1024 = vsel %vm1023, %v991, %v659
      %v1025 = vsel %vm1023, %v992, %v661
      %v1026 = vsel %vm1023, %v993, %v663
      %v1027 = vsel %vm1023, %v994, %v665
      %v1028 = vsel %vm1023, %v995, %v667
      %v1029 = vsel %vm1023, %v996, %v669
      %v1030 = vsel %vm1023, %v997, %v671
      %v1031 = vsel %vm1023, %v998, %v673
      %v1032 = vsel %vm1023, %v999, %v675
      %v1033 = vsel %vm1023, %v1000, %v677
      %v1034 = vsel %vm1023, %v1001, %v679
      %v1035 = vsel %vm1023, %v1002, %v681
      %v1036 = vsel %vm1023, %v1003, %v683
      %v1037 = vsel %vm1023, %v1004, %v685
      %v1038 = vsel %vm1023, %v1005, %v687
      %v1039 = vsel %vm1023, %v1006, %v689
      %v1040 = vsel %vm1023, %v1007, %v691
      %v1041 = vsel %vm1023, %v1008, %v693
      %v1042 = vsel %vm1023, %v1009, %v695
      %v1043 = vsel %vm1023, %v1010, %v697
      %v1044 = vsel %vm1023, %v1011, %v699
      %v1045 = vsel %vm1023, %v1012, %v701
      %v1046 = vsel %vm1023, %v1013, %v703
      %v1047 = vsel %vm1023, %v1014, %v705
      %v1048 = vsel %vm1023, %v1015, %v707
      %v1049 = vsel %vm1023, %v1016, %v709
      %v1050 = vsel %vm1023, %v1017, %v711
      %v1051 = vsel %vm1023, %v1018, %v713
      %v1052 = vsel %vm1023, %v1019, %v715
      %v1053 = vsel %vm1023, %v1020, %v717
      %v1054 = vsel %vm1023, %v1021, %v719
      %v1055 = vsel %vm1023, %v1022, %v721
      %vm1056 = vcmask 785408
      %v1057 = vsel %vm1056, %v1024, %v761
      %v1058 = vsel %vm1056, %v1025, %v763
      %v1059 = vsel %vm1056, %v1026, %v765
      %v1060 = vsel %vm1056, %v1027, %v767
      %v1061 = vsel %vm1056, %v1028, %v769
      %v1062 = vsel %vm1056, %v1029, %v771
      %v1063 = vsel %vm1056, %v1030, %v773
      %v1064 = vsel %vm1056, %v1031, %v775
      %v1065 = vsel %vm1056, %v1032, %v777
      %v1066 = vsel %vm1056, %v1033, %v779
      %v1067 = vsel %vm1056, %v1034, %v781
      %v1068 = vsel %vm1056, %v1035, %v783
      %v1069 = vsel %vm1056, %v1036, %v785
      %v1070 = vsel %vm1056, %v1037, %v787
      %v1071 = vsel %vm1056, %v1038, %v789
      %v1072 = vsel %vm1056, %v1039, %v791
      %v1073 = vsel %vm1056, %v1040, %v793
      %v1074 = vsel %vm1056, %v1041, %v795
      %v1075 = vsel %vm1056, %v1042, %v797
      %v1076 = vsel %vm1056, %v1043, %v799
      %v1077 = vsel %vm1056, %v1044, %v801
      %v1078 = vsel %vm1056, %v1045, %v803
      %v1079 = vsel %vm1056, %v1046, %v805
      %v1080 = vsel %vm1056, %v1047, %v807
      %v1081 = vsel %vm1056, %v1048, %v809
      %v1082 = vsel %vm1056, %v1049, %v811
      %v1083 = vsel %vm1056, %v1050, %v813
      %v1084 = vsel %vm1056, %v1051, %v815
      %v1085 = vsel %vm1056, %v1052, %v817
      %v1086 = vsel %vm1056, %v1053, %v819
      %v1087 = vsel %vm1056, %v1054, %v821
      %v1088 = vsel %vm1056, %v1055, %v823
      %vm1089 = vcmask 982016
      %v1090 = vsel %vm1089, %v1057, %v862
      %v1091 = vsel %vm1089, %v1058, %v864
      %v1092 = vsel %vm1089, %v1059, %v866
      %v1093 = vsel %vm1089, %v1060, %v868
      %v1094 = vsel %vm1089, %v1061, %v870
      %v1095 = vsel %vm1089, %v1062, %v872
      %v1096 = vsel %vm1089, %v1063, %v874
      %v1097 = vsel %vm1089, %v1064, %v876
      %v1098 = vsel %vm1089, %v1065, %v878
      %v1099 = vsel %vm1089, %v1066, %v880
      %v1100 = vsel %vm1089, %v1067, %v882
      %v1101 = vsel %vm1089, %v1068, %v884
      %v1102 = vsel %vm1089, %v1069, %v886
      %v1103 = vsel %vm1089, %v1070, %v888
      %v1104 = vsel %vm1089, %v1071, %v890
      %v1105 = vsel %vm1089, %v1072, %v892
      %v1106 = vsel %vm1089, %v1073, %v894
      %v1107 = vsel %vm1089, %v1074, %v896
      %v1108 = vsel %vm1089, %v1075, %v898
      %v1109 = vsel %vm1089, %v1076, %v900
      %v1110 = vsel %vm1089, %v1077, %v902
      %v1111 = vsel %vm1089, %v1078, %v904
      %v1112 = vsel %vm1089, %v1079, %v906
      %v1113 = vsel %vm1089, %v1080, %v908
      %v1114 = vsel %vm1089, %v1081, %v910
      %v1115 = vsel %vm1089, %v1082, %v912
      %v1116 = vsel %vm1089, %v1083, %v914
      %v1117 = vsel %vm1089, %v1084, %v916
      %v1118 = vsel %vm1089, %v1085, %v918
      %v1119 = vsel %vm1089, %v1086, %v920
      %v1120 = vsel %vm1089, %v1087, %v922
      %v1121 = vsel %vm1089, %v1088, %v924
      %v1122 = vpack.c.bf16 %v1091, %v1090
      %v1123 = vpack.c.bf16 %v864, %v862
      %v1124 = vpack.c.bf16 %v1093, %v1092
      %v1125 = vpack.c.bf16 %v868, %v866
      %v1126 = vpack.c.bf16 %v1095, %v1094
      %v1127 = vpack.c.bf16 %v872, %v870
      %v1128 = vpack.c.bf16 %v1097, %v1096
      %v1129 = vpack.c.bf16 %v876, %v874
      %v1130 = vpack.c.bf16 %v1099, %v1098
      %v1131 = vpack.c.bf16 %v880, %v878
      %v1132 = vpack.c.bf16 %v1101, %v1100
      %v1133 = vpack.c.bf16 %v884, %v882
      %v1134 = vpack.c.bf16 %v1103, %v1102
      %v1135 = vpack.c.bf16 %v888, %v886
      %v1136 = vpack.c.bf16 %v1105, %v1104
      %v1137 = vpack.c.bf16 %v892, %v890
      %v1138 = vpack.c.bf16 %v1107, %v1106
      %v1139 = vpack.c.bf16 %v896, %v894
      %v1140 = vpack.c.bf16 %v1109, %v1108
      %v1141 = vpack.c.bf16 %v900, %v898
      %v1142 = vpack.c.bf16 %v1111, %v1110
      %v1143 = vpack.c.bf16 %v904, %v902
      %v1144 = vpack.c.bf16 %v1113, %v1112
      %v1145 = vpack.c.bf16 %v908, %v906
      %v1146 = vpack.c.bf16 %v1115, %v1114
      %v1147 = vpack.c.bf16 %v912, %v910
      %v1148 = vpack.c.bf16 %v1117, %v1116
      %v1149 = vpack.c.bf16 %v916, %v914
      %v1150 = vpack.c.bf16 %v1119, %v1118
      %v1151 = vpack.c.bf16 %v920, %v918
      %v1152 = vpack.c.bf16 %v1121, %v1120
      %v1153 = vpack.c.bf16 %v924, %v922
      %v1154 = vld [vmem:[%s1] sm:$0xf]
      %v1155 = vld [vmem:[%s1 + $0x4] sm:$0xf]
      %v1156 = vld [vmem:[%s1 + $0x8] sm:$0xf]
      %v1157 = vld [vmem:[%s1 + $0xc] sm:$0xf]
      %v1158 = vld [vmem:[%s1 + $0x10] sm:$0xf]
      %v1159 = vld [vmem:[%s1 + $0x14] sm:$0xf]
      %v1160 = vld [vmem:[%s1 + $0x18] sm:$0xf]
      %v1161 = vld [vmem:[%s1 + $0x1c] sm:$0xf]
      %v1162 = vld [vmem:[%s1 + $0x20] sm:$0xf]
      %v1163 = vld [vmem:[%s1 + $0x24] sm:$0xf]
      %v1164 = vld [vmem:[%s1 + $0x28] sm:$0xf]
      %v1165 = vld [vmem:[%s1 + $0x2c] sm:$0xf]
      %v1166 = vld [vmem:[%s1 + $0x30] sm:$0xf]
      %v1167 = vld [vmem:[%s1 + $0x34] sm:$0xf]
      %v1168 = vld [vmem:[%s1 + $0x38] sm:$0xf]
      %v1169 = vld [vmem:[%s1 + $0x3c] sm:$0xf]
      %v1170 = vld [vmem:[%s1 + $0x40] sm:$0xf]
      %v1171 = vld [vmem:[%s1 + $0x44] sm:$0xf]
      %v1172 = vld [vmem:[%s2] sm:$0x1]
      %v1174 = vlaneseq
      %v1175 = vshrl.u32 %v1174, 7
      %v1176 = vsub.s32 0, %v1175
      %v1177 = vrot.slane %v1172, %v1176
      %v1197 = vunpack.c.l.b16 %v1154
      %v1198 = vunpack.c.l.b16 %v1155
      %v1199 = vunpack.c.l.b16 %v1156
      %v1200 = vunpack.c.l.b16 %v1157
      %v1201 = vunpack.c.l.b16 %v1158
      %v1202 = vunpack.c.l.b16 %v1159
      %v1203 = vunpack.c.l.b16 %v1160
      %v1204 = vunpack.c.l.b16 %v1161
      %v1205 = vunpack.c.l.b16 %v1162
      %v1206 = vunpack.c.l.b16 %v1163
      %v1207 = vunpack.c.l.b16 %v1164
      %v1208 = vunpack.c.l.b16 %v1165
      %v1209 = vunpack.c.l.b16 %v1166
      %v1210 = vunpack.c.l.b16 %v1167
      %v1211 = vunpack.c.l.b16 %v1168
      %v1212 = vunpack.c.l.b16 %v1169
      %v1213 = vunpack.c.l.b16 %v1170
      %v1214 = vunpack.c.l.b16 %v1171
      %v1215 = vpack.c.b16 %v1198, %v1197
      %v1216 = vpack.c.b16 %v1200, %v1199
      %v1217 = vpack.c.b16 %v1202, %v1201
      %v1218 = vpack.c.b16 %v1204, %v1203
      %v1219 = vpack.c.b16 %v1206, %v1205
      %v1220 = vpack.c.b16 %v1208, %v1207
      %v1221 = vpack.c.b16 %v1210, %v1209
      %v1222 = vpack.c.b16 %v1212, %v1211
      %v1223 = vpack.c.b16 %v1214, %v1213
      %vm1233 = vcmask 130048
      %v1235 = vsel %vm1233, %v1123, 0
      %v1238 = vsel %vm1233, %v1125, 0
      %v1241 = vsel %vm1233, %v1127, 0
      %v1244 = vsel %vm1233, %v1129, 0
      %v1247 = vsel %vm1233, %v1131, 0
      %v1250 = vsel %vm1233, %v1133, 0
      %v1253 = vsel %vm1233, %v1135, 0
      %v1256 = vsel %vm1233, %v1137, 0
      %v1259 = vsel %vm1233, %v1139, 0
      %v1262 = vsel %vm1233, %v1141, 0
      %v1265 = vsel %vm1233, %v1143, 0
      %v1268 = vsel %vm1233, %v1145, 0
      %v1271 = vsel %vm1233, %v1147, 0
      %v1274 = vsel %vm1233, %v1149, 0
      %v1277 = vsel %vm1233, %v1151, 0
      %v1280 = vsel %vm1233, %v1153, 0
      %1282 = vmatprep.subr.bf16.mxu0 0
      %1283 = vmatpush1.bf16.msra.mxu0 %v1215
      %1284 = vmatprep.subr.bf16.mxu0 0
      %1285 = vmatpush1.bf16.msra.mxu0 %v1216
      %1286 = vmatprep.subr.bf16.mxu0 0
      %1287 = vmatpush1.bf16.msra.mxu0 %v1217
      %1288 = vmatprep.subr.bf16.mxu0 0
      %1289 = vmatpush1.bf16.msra.mxu0 %v1218
      %1290 = vmatprep.subr.bf16.mxu0 0
      %1291 = vmatpush1.bf16.msra.mxu0 %v1219
      %1292 = vmatprep.subr.bf16.mxu0 0
      %1293 = vmatpush1.bf16.msra.mxu0 %v1220
      %1294 = vmatprep.subr.bf16.mxu0 0
      %1295 = vmatpush1.bf16.msra.mxu0 %v1221
      %1296 = vmatprep.subr.bf16.mxu0 0
      %1297 = vmatpush1.bf16.msra.mxu0 %v1222
      %1298 = vmatprep.subr.bf16.mxu0 0
      %1299 = vmatpush1.bf16.msra.mxu0 %v1223
      %1300 = vmatprep.subr.bf16.mxu0 0
      %1301 = vmatpush1.bf16.msra.mxu0 0
      %1302 = vmatprep.subr.bf16.mxu0 0
      %1303 = vmatpush1.bf16.msra.mxu0 0
      %1304 = vmatprep.subr.bf16.mxu0 0
      %1305 = vmatpush1.bf16.msra.mxu0 0
      %1306 = vmatprep.subr.bf16.mxu0 0
      %1307 = vmatpush1.bf16.msra.mxu0 0
      %1308 = vmatprep.subr.bf16.mxu0 0
      %1309 = vmatpush1.bf16.msra.mxu0 0
      %1310 = vmatprep.subr.bf16.mxu0 0
      %1311 = vmatpush1.bf16.msra.mxu0 0
      %1312 = vmatprep.subr.bf16.mxu0 0
      %1313 = vmatpush1.bf16.msra.mxu0 0
      %1314 = vmatprep.mubr.bf16.mxu0 %v1235
      %1315 = vmatmul.mubr.bf16.gmra.mrb[0].mxu0 %v1122
      %v1316 = vpop.f32.mrb[0].mxu0
      %v1317 = vadd.f32 %v1177, %v1316
      %v1318 = vpop.f32.mrb[0].mxu0
      %v1319 = vpop.f32.mrb[0].mxu0
      %v1320 = vadd.f32 %v1177, %v1319
      %v1321 = vpop.f32.mrb[0].mxu0
      %1322 = vmatprep.mubr.bf16.mxu0 %v1238
      %1323 = vmatmul.mubr.bf16.gmra.mrb[0].mxu0 %v1124
      %v1324 = vpop.f32.mrb[0].mxu0
      %v1325 = vadd.f32 %v1177, %v1324
      %v1326 = vpop.f32.mrb[0].mxu0
      %v1327 = vpop.f32.mrb[0].mxu0
      %v1328 = vadd.f32 %v1177, %v1327
      %v1329 = vpop.f32.mrb[0].mxu0
      %1330 = vmatprep.mubr.bf16.mxu0 %v1241
      %1331 = vmatmul.mubr.bf16.gmra.mrb[0].mxu0 %v1126
      %v1332 = vpop.f32.mrb[0].mxu0
      %v1333 = vadd.f32 %v1177, %v1332
      %v1334 = vpop.f32.mrb[0].mxu0
      %v1335 = vpop.f32.mrb[0].mxu0
      %v1336 = vadd.f32 %v1177, %v1335
      %v1337 = vpop.f32.mrb[0].mxu0
      %1338 = vmatprep.mubr.bf16.mxu0 %v1244
      %1339 = vmatmul.mubr.bf16.gmra.mrb[0].mxu0 %v1128
      %v1340 = vpop.f32.mrb[0].mxu0
      %v1341 = vadd.f32 %v1177, %v1340
      %v1342 = vpop.f32.mrb[0].mxu0
      %v1343 = vpop.f32.mrb[0].mxu0
      %v1344 = vadd.f32 %v1177, %v1343
      %v1345 = vpop.f32.mrb[0].mxu0
      %1346 = vmatprep.mubr.bf16.mxu0 %v1247
      %1347 = vmatmul.mubr.bf16.gmra.mrb[0].mxu0 %v1130
      %v1348 = vpop.f32.mrb[0].mxu0
      %v1349 = vadd.f32 %v1177, %v1348
      %v1350 = vpop.f32.mrb[0].mxu0
      %v1351 = vpop.f32.mrb[0].mxu0
      %v1352 = vadd.f32 %v1177, %v1351
      %v1353 = vpop.f32.mrb[0].mxu0
      %1354 = vmatprep.mubr.bf16.mxu0 %v1250
      %1355 = vmatmul.mubr.bf16.gmra.mrb[0].mxu0 %v1132
      %v1356 = vpop.f32.mrb[0].mxu0
      %v1357 = vadd.f32 %v1177, %v1356
      %v1358 = vpop.f32.mrb[0].mxu0
      %v1359 = vpop.f32.mrb[0].mxu0
      %v1360 = vadd.f32 %v1177, %v1359
      %v1361 = vpop.f32.mrb[0].mxu0
      %1362 = vmatprep.mubr.bf16.mxu0 %v1253
      %1363 = vmatmul.mubr.bf16.gmra.mrb[0].mxu0 %v1134
      %v1364 = vpop.f32.mrb[0].mxu0
      %v1365 = vadd.f32 %v1177, %v1364
      %v1366 = vpop.f32.mrb[0].mxu0
      %v1367 = vpop.f32.mrb[0].mxu0
      %v1368 = vadd.f32 %v1177, %v1367
      %v1369 = vpop.f32.mrb[0].mxu0
      %1370 = vmatprep.mubr.bf16.mxu0 %v1256
      %1371 = vmatmul.mubr.bf16.gmra.mrb[0].mxu0 %v1136
      %v1372 = vpop.f32.mrb[0].mxu0
      %v1373 = vadd.f32 %v1177, %v1372
      %v1374 = vpop.f32.mrb[0].mxu0
      %v1375 = vpop.f32.mrb[0].mxu0
      %v1376 = vadd.f32 %v1177, %v1375
      %v1377 = vpop.f32.mrb[0].mxu0
      %1378 = vmatprep.mubr.bf16.mxu0 %v1259
      %1379 = vmatmul.mubr.bf16.gmra.mrb[0].mxu0 %v1138
      %v1380 = vpop.f32.mrb[0].mxu0
      %v1381 = vadd.f32 %v1177, %v1380
      %v1382 = vpop.f32.mrb[0].mxu0
      %v1383 = vpop.f32.mrb[0].mxu0
      %v1384 = vadd.f32 %v1177, %v1383
      %v1385 = vpop.f32.mrb[0].mxu0
      %1386 = vmatprep.mubr.bf16.mxu0 %v1262
      %1387 = vmatmul.mubr.bf16.gmra.mrb[0].mxu0 %v1140
      %v1388 = vpop.f32.mrb[0].mxu0
      %v1389 = vadd.f32 %v1177, %v1388
      %v1390 = vpop.f32.mrb[0].mxu0
      %v1391 = vpop.f32.mrb[0].mxu0
      %v1392 = vadd.f32 %v1177, %v1391
      %v1393 = vpop.f32.mrb[0].mxu0
      %1394 = vmatprep.mubr.bf16.mxu0 %v1265
      %1395 = vmatmul.mubr.bf16.gmra.mrb[0].mxu0 %v1142
      %v1396 = vpop.f32.mrb[0].mxu0
      %v1397 = vadd.f32 %v1177, %v1396
      %v1398 = vpop.f32.mrb[0].mxu0
      %v1399 = vpop.f32.mrb[0].mxu0
      %v1400 = vadd.f32 %v1177, %v1399
      %v1401 = vpop.f32.mrb[0].mxu0
      %1402 = vmatprep.mubr.bf16.mxu0 %v1268
      %1403 = vmatmul.mubr.bf16.gmra.mrb[0].mxu0 %v1144
      %v1404 = vpop.f32.mrb[0].mxu0
      %v1405 = vadd.f32 %v1177, %v1404
      %v1406 = vpop.f32.mrb[0].mxu0
      %v1407 = vpop.f32.mrb[0].mxu0
      %v1408 = vadd.f32 %v1177, %v1407
      %v1409 = vpop.f32.mrb[0].mxu0
      %1410 = vmatprep.mubr.bf16.mxu0 %v1271
      %1411 = vmatmul.mubr.bf16.gmra.mrb[0].mxu0 %v1146
      %v1412 = vpop.f32.mrb[0].mxu0
      %v1413 = vadd.f32 %v1177, %v1412
      %v1414 = vpop.f32.mrb[0].mxu0
      %v1415 = vpop.f32.mrb[0].mxu0
      %v1416 = vadd.f32 %v1177, %v1415
      %v1417 = vpop.f32.mrb[0].mxu0
      %1418 = vmatprep.mubr.bf16.mxu0 %v1274
      %1419 = vmatmul.mubr.bf16.gmra.mrb[0].mxu0 %v1148
      %v1420 = vpop.f32.mrb[0].mxu0
      %v1421 = vadd.f32 %v1177, %v1420
      %v1422 = vpop.f32.mrb[0].mxu0
      %v1423 = vpop.f32.mrb[0].mxu0
      %v1424 = vadd.f32 %v1177, %v1423
      %v1425 = vpop.f32.mrb[0].mxu0
      %1426 = vmatprep.mubr.bf16.mxu0 %v1277
      %1427 = vmatmul.mubr.bf16.gmra.mrb[0].mxu0 %v1150
      %v1428 = vpop.f32.mrb[0].mxu0
      %v1429 = vadd.f32 %v1177, %v1428
      %v1430 = vpop.f32.mrb[0].mxu0
      %v1431 = vpop.f32.mrb[0].mxu0
      %v1432 = vadd.f32 %v1177, %v1431
      %v1433 = vpop.f32.mrb[0].mxu0
      %1434 = vmatprep.mubr.bf16.mxu0 %v1280
      %1435 = vmatmul.mubr.bf16.gmra.mrb[0].mxu0 %v1152
      %v1436 = vpop.f32.mrb[0].mxu0
      %v1437 = vadd.f32 %v1177, %v1436
      %v1438 = vpop.f32.mrb[0].mxu0
      %v1439 = vpop.f32.mrb[0].mxu0
      %v1440 = vadd.f32 %v1177, %v1439
      %v1441 = vpop.f32.mrb[0].mxu0
      %1442 = vdwg.mxu0
      %v1443 = vadd.f32 %v1317, 3.0
      %v1444 = vadd.f32 %v1320, 3.0
      %v1445 = vadd.f32 %v1325, 3.0
      %v1446 = vadd.f32 %v1328, 3.0
      %v1447 = vadd.f32 %v1333, 3.0
      %v1448 = vadd.f32 %v1336, 3.0
      %v1449 = vadd.f32 %v1341, 3.0
      %v1450 = vadd.f32 %v1344, 3.0
      %v1451 = vadd.f32 %v1349, 3.0
      %v1452 = vadd.f32 %v1352, 3.0
      %v1453 = vadd.f32 %v1357, 3.0
      %v1454 = vadd.f32 %v1360, 3.0
      %v1455 = vadd.f32 %v1365, 3.0
      %v1456 = vadd.f32 %v1368, 3.0
      %v1457 = vadd.f32 %v1373, 3.0
      %v1458 = vadd.f32 %v1376, 3.0
      %v1459 = vadd.f32 %v1381, 3.0
      %v1460 = vadd.f32 %v1384, 3.0
      %v1461 = vadd.f32 %v1389, 3.0
      %v1462 = vadd.f32 %v1392, 3.0
      %v1463 = vadd.f32 %v1397, 3.0
      %v1464 = vadd.f32 %v1400, 3.0
      %v1465 = vadd.f32 %v1405, 3.0
      %v1466 = vadd.f32 %v1408, 3.0
      %v1467 = vadd.f32 %v1413, 3.0
      %v1468 = vadd.f32 %v1416, 3.0
      %v1469 = vadd.f32 %v1421, 3.0
      %v1470 = vadd.f32 %v1424, 3.0
      %v1471 = vadd.f32 %v1429, 3.0
      %v1472 = vadd.f32 %v1432, 3.0
      %v1473 = vadd.f32 %v1437, 3.0
      %v1474 = vadd.f32 %v1440, 3.0
      %v1475 = vmax.f32 %v1443, 0.0
      %v1476 = vmax.f32 %v1444, 0.0
      %v1477 = vmax.f32 %v1445, 0.0
      %v1478 = vmax.f32 %v1446, 0.0
      %v1479 = vmax.f32 %v1447, 0.0
      %v1480 = vmax.f32 %v1448, 0.0
      %v1481 = vmax.f32 %v1449, 0.0
      %v1482 = vmax.f32 %v1450, 0.0
      %v1483 = vmax.f32 %v1451, 0.0
      %v1484 = vmax.f32 %v1452, 0.0
      %v1485 = vmax.f32 %v1453, 0.0
      %v1486 = vmax.f32 %v1454, 0.0
      %v1487 = vmax.f32 %v1455, 0.0
      %v1488 = vmax.f32 %v1456, 0.0
      %v1489 = vmax.f32 %v1457, 0.0
      %v1490 = vmax.f32 %v1458, 0.0
      %v1491 = vmax.f32 %v1459, 0.0
      %v1492 = vmax.f32 %v1460, 0.0
      %v1493 = vmax.f32 %v1461, 0.0
      %v1494 = vmax.f32 %v1462, 0.0
      %v1495 = vmax.f32 %v1463, 0.0
      %v1496 = vmax.f32 %v1464, 0.0
      %v1497 = vmax.f32 %v1465, 0.0
      %v1498 = vmax.f32 %v1466, 0.0
      %v1499 = vmax.f32 %v1467, 0.0
      %v1500 = vmax.f32 %v1468, 0.0
      %v1501 = vmax.f32 %v1469, 0.0
      %v1502 = vmax.f32 %v1470, 0.0
      %v1503 = vmax.f32 %v1471, 0.0
      %v1504 = vmax.f32 %v1472, 0.0
      %v1505 = vmax.f32 %v1473, 0.0
      %v1506 = vmax.f32 %v1474, 0.0
      %v1507 = vmin.f32 %v1475, 6.0
      %v1508 = vmin.f32 %v1476, 6.0
      %v1509 = vmin.f32 %v1477, 6.0
      %v1510 = vmin.f32 %v1478, 6.0
      %v1511 = vmin.f32 %v1479, 6.0
      %v1512 = vmin.f32 %v1480, 6.0
      %v1513 = vmin.f32 %v1481, 6.0
      %v1514 = vmin.f32 %v1482, 6.0
      %v1515 = vmin.f32 %v1483, 6.0
      %v1516 = vmin.f32 %v1484, 6.0
      %v1517 = vmin.f32 %v1485, 6.0
      %v1518 = vmin.f32 %v1486, 6.0
      %v1519 = vmin.f32 %v1487, 6.0
      %v1520 = vmin.f32 %v1488, 6.0
      %v1521 = vmin.f32 %v1489, 6.0
      %v1522 = vmin.f32 %v1490, 6.0
      %v1523 = vmin.f32 %v1491, 6.0
      %v1524 = vmin.f32 %v1492, 6.0
      %v1525 = vmin.f32 %v1493, 6.0
      %v1526 = vmin.f32 %v1494, 6.0
      %v1527 = vmin.f32 %v1495, 6.0
      %v1528 = vmin.f32 %v1496, 6.0
      %v1529 = vmin.f32 %v1497, 6.0
      %v1530 = vmin.f32 %v1498, 6.0
      %v1531 = vmin.f32 %v1499, 6.0
      %v1532 = vmin.f32 %v1500, 6.0
      %v1533 = vmin.f32 %v1501, 6.0
      %v1534 = vmin.f32 %v1502, 6.0
      %v1535 = vmin.f32 %v1503, 6.0
      %v1536 = vmin.f32 %v1504, 6.0
      %v1537 = vmin.f32 %v1505, 6.0
      %v1538 = vmin.f32 %v1506, 6.0
      %v1539 = vmul.f32 %v1317, %v1507
      %v1540 = vmul.f32 %v1320, %v1508
      %v1541 = vmul.f32 %v1325, %v1509
      %v1542 = vmul.f32 %v1328, %v1510
      %v1543 = vmul.f32 %v1333, %v1511
      %v1544 = vmul.f32 %v1336, %v1512
      %v1545 = vmul.f32 %v1341, %v1513
      %v1546 = vmul.f32 %v1344, %v1514
      %v1547 = vmul.f32 %v1349, %v1515
      %v1548 = vmul.f32 %v1352, %v1516
      %v1549 = vmul.f32 %v1357, %v1517
      %v1550 = vmul.f32 %v1360, %v1518
      %v1551 = vmul.f32 %v1365, %v1519
      %v1552 = vmul.f32 %v1368, %v1520
      %v1553 = vmul.f32 %v1373, %v1521
      %v1554 = vmul.f32 %v1376, %v1522
      %v1555 = vmul.f32 %v1381, %v1523
      %v1556 = vmul.f32 %v1384, %v1524
      %v1557 = vmul.f32 %v1389, %v1525
      %v1558 = vmul.f32 %v1392, %v1526
      %v1559 = vmul.f32 %v1397, %v1527
      %v1560 = vmul.f32 %v1400, %v1528
      %v1561 = vmul.f32 %v1405, %v1529
      %v1562 = vmul.f32 %v1408, %v1530
      %v1563 = vmul.f32 %v1413, %v1531
      %v1564 = vmul.f32 %v1416, %v1532
      %v1565 = vmul.f32 %v1421, %v1533
      %v1566 = vmul.f32 %v1424, %v1534
      %v1567 = vmul.f32 %v1429, %v1535
      %v1568 = vmul.f32 %v1432, %v1536
      %v1569 = vmul.f32 %v1437, %v1537
      %v1570 = vmul.f32 %v1440, %v1538
      %v1571 = vmul.f32 %v1539, 0.16666667
      %v1572 = vmul.f32 %v1540, 0.16666667
      %v1573 = vmul.f32 %v1541, 0.16666667
      %v1574 = vmul.f32 %v1542, 0.16666667
      %v1575 = vmul.f32 %v1543, 0.16666667
      %v1576 = vmul.f32 %v1544, 0.16666667
      %v1577 = vmul.f32 %v1545, 0.16666667
      %v1578 = vmul.f32 %v1546, 0.16666667
      %v1579 = vmul.f32 %v1547, 0.16666667
      %v1580 = vmul.f32 %v1548, 0.16666667
      %v1581 = vmul.f32 %v1549, 0.16666667
      %v1582 = vmul.f32 %v1550, 0.16666667
      %v1583 = vmul.f32 %v1551, 0.16666667
      %v1584 = vmul.f32 %v1552, 0.16666667
      %v1585 = vmul.f32 %v1553, 0.16666667
      %v1586 = vmul.f32 %v1554, 0.16666667
      %v1587 = vmul.f32 %v1555, 0.16666667
      %v1588 = vmul.f32 %v1556, 0.16666667
      %v1589 = vmul.f32 %v1557, 0.16666667
      %v1590 = vmul.f32 %v1558, 0.16666667
      %v1591 = vmul.f32 %v1559, 0.16666667
      %v1592 = vmul.f32 %v1560, 0.16666667
      %v1593 = vmul.f32 %v1561, 0.16666667
      %v1594 = vmul.f32 %v1562, 0.16666667
      %v1595 = vmul.f32 %v1563, 0.16666667
      %v1596 = vmul.f32 %v1564, 0.16666667
      %v1597 = vmul.f32 %v1565, 0.16666667
      %v1598 = vmul.f32 %v1566, 0.16666667
      %v1599 = vmul.f32 %v1567, 0.16666667
      %v1600 = vmul.f32 %v1568, 0.16666667
      %v1601 = vmul.f32 %v1569, 0.16666667
      %v1602 = vmul.f32 %v1570, 0.16666667
      %1603 = vst.msk [vmem:[%s194] sm:$0xff] %vm990, %v1571
      %1604 = vst.msk [vmem:[%s194 + $0x8] sm:$0xff] %vm990, %v1572
      %1605 = vst.msk [vmem:[%s194 + $0x10] sm:$0xff] %vm990, %v1573
      %1606 = vst.msk [vmem:[%s194 + $0x18] sm:$0xff] %vm990, %v1574
      %1607 = vst.msk [vmem:[%s194 + $0x20] sm:$0xff] %vm990, %v1575
      %1608 = vst.msk [vmem:[%s194 + $0x28] sm:$0xff] %vm990, %v1576
      %1609 = vst.msk [vmem:[%s194 + $0x30] sm:$0xff] %vm990, %v1577
      %1610 = vst.msk [vmem:[%s194 + $0x38] sm:$0xff] %vm990, %v1578
      %1611 = vst.msk [vmem:[%s194 + $0x40] sm:$0xff] %vm990, %v1579
      %1612 = vst.msk [vmem:[%s194 + $0x48] sm:$0xff] %vm990, %v1580
      %1613 = vst.msk [vmem:[%s194 + $0x50] sm:$0xff] %vm990, %v1581
      %1614 = vst.msk [vmem:[%s194 + $0x58] sm:$0xff] %vm990, %v1582
      %1615 = vst.msk [vmem:[%s194 + $0x60] sm:$0xff] %vm990, %v1583
      %1616 = vst.msk [vmem:[%s194 + $0x68] sm:$0xff] %vm990, %v1584
      %1617 = vst.msk [vmem:[%s194 + $0x70] sm:$0xff] %vm990, %v1585
      %1618 = vst.msk [vmem:[%s194 + $0x78] sm:$0xff] %vm990, %v1586
      %1619 = vst.msk [vmem:[%s194 + $0x80] sm:$0xff] %vm990, %v1587
      %1620 = vst.msk [vmem:[%s194 + $0x88] sm:$0xff] %vm990, %v1588
      %1621 = vst.msk [vmem:[%s194 + $0x90] sm:$0xff] %vm990, %v1589
      %1622 = vst.msk [vmem:[%s194 + $0x98] sm:$0xff] %vm990, %v1590
      %1623 = vst.msk [vmem:[%s194 + $0xa0] sm:$0xff] %vm990, %v1591
      %1624 = vst.msk [vmem:[%s194 + $0xa8] sm:$0xff] %vm990, %v1592
      %1625 = vst.msk [vmem:[%s194 + $0xb0] sm:$0xff] %vm990, %v1593
      %1626 = vst.msk [vmem:[%s194 + $0xb8] sm:$0xff] %vm990, %v1594
      %1627 = vst.msk [vmem:[%s194 + $0xc0] sm:$0xff] %vm990, %v1595
      %1628 = vst.msk [vmem:[%s194 + $0xc8] sm:$0xff] %vm990, %v1596
      %1629 = vst.msk [vmem:[%s194 + $0xd0] sm:$0xff] %vm990, %v1597
      %1630 = vst.msk [vmem:[%s194 + $0xd8] sm:$0xff] %vm990, %v1598
      %1631 = vst.msk [vmem:[%s194 + $0xe0] sm:$0xff] %vm990, %v1599
      %1632 = vst.msk [vmem:[%s194 + $0xe8] sm:$0xff] %vm990, %v1600
      %1633 = vst.msk [vmem:[%s194 + $0xf0] sm:$0xff] %vm990, %v1601
      %1634 = vst.msk [vmem:[%s194 + $0xf8] sm:$0xff] %vm990, %v1602
      %1635 = vrot.lane.b32.xlu0 %v757, 24
      %v1636 = vpop.permute.xlu0 %1635
      %1637 = vrot.lane.b32.xlu0 %v759, 24
      %v1638 = vpop.permute.xlu0 %1637
      %1641 = vrot.lane.b32.xlu0 %v858, 48
      %v1642 = vpop.permute.xlu0 %1641
      %1643 = vrot.lane.b32.xlu0 %v860, 48
      %v1644 = vpop.permute.xlu0 %1643
      %1649 = vrot.lane.b32.xlu0 %v251, 72
      %v1650 = vpop.permute.xlu0 %1649
      %1651 = vrot.lane.b32.xlu0 %v252, 72
      %v1652 = vpop.permute.xlu0 %1651
      %v1656 = vrot.slane %v251, 1
      %v1657 = vrot.slane %v252, 1
      %v1658 = vsel %vm302, %v1656, %v1657
      %v1659 = vrot.slane %v253, 1
      %v1660 = vsel %vm302, %v1657, %v1659
      %1661 = vrot.lane.b32.xlu0 %v1658, 96
      %v1662 = vpop.permute.xlu0 %1661
      %1663 = vrot.lane.b32.xlu0 %v1660, 96
      %v1664 = vpop.permute.xlu0 %1663
      %v1667 = vrot.slane %v251, 2
      %v1668 = vrot.slane %v252, 2
      %v1669 = vsel %vm479, %v1667, %v1668
      %v1670 = vrot.slane %v253, 2
      %v1671 = vsel %vm479, %v1668, %v1670
      %1672 = vrot.lane.b32.xlu0 %v1669, 120
      %v1673 = vpop.permute.xlu0 %1672
      %1674 = vrot.lane.b32.xlu0 %v1671, 120
      %v1675 = vpop.permute.xlu0 %1674
      %v1678 = vsel %vm957, %v248, %v1636
      %v1679 = vsel %vm957, %v249, %v1638
      %v1680 = vsel %vm990, %v1678, %v1642
      %v1681 = vsel %vm990, %v1679, %v1644
      %v1682 = vsel %vm1023, %v1680, %v1650
      %v1683 = vsel %vm1023, %v1681, %v1652
      %v1684 = vsel %vm1056, %v1682, %v1662
      %v1685 = vsel %vm1056, %v1683, %v1664
      %v1686 = vsel %vm1089, %v1684, %v1673
      %v1687 = vsel %vm1089, %v1685, %v1675
      %v1688 = vpack.c.bf16 %v1687, %v1686
      %v1689 = vpack.c.bf16 %v1675, %v1673
      %s1690 = scalar_lea.vmem %s1, 72
      %v1691 = vld [vmem:[%s1690] sm:$0xf]
      %v1692 = vld [vmem:[%s1690 + $0x4] sm:$0xf]
      %v1693 = vld [vmem:[%s1690 + $0x8] sm:$0xf]
      %v1694 = vld [vmem:[%s1690 + $0xc] sm:$0xf]
      %v1695 = vld [vmem:[%s1690 + $0x10] sm:$0xf]
      %v1696 = vld [vmem:[%s1690 + $0x14] sm:$0xf]
      %v1697 = vld [vmem:[%s1690 + $0x18] sm:$0xf]
      %v1698 = vld [vmem:[%s1690 + $0x1c] sm:$0xf]
      %v1699 = vld [vmem:[%s1690 + $0x20] sm:$0xf]
      %v1700 = vld [vmem:[%s1690 + $0x24] sm:$0xf]
      %v1701 = vld [vmem:[%s1690 + $0x28] sm:$0xf]
      %v1702 = vld [vmem:[%s1690 + $0x2c] sm:$0xf]
      %v1703 = vld [vmem:[%s1690 + $0x30] sm:$0xf]
      %v1704 = vld [vmem:[%s1690 + $0x34] sm:$0xf]
      %v1705 = vld [vmem:[%s1690 + $0x38] sm:$0xf]
      %v1706 = vld [vmem:[%s1690 + $0x3c] sm:$0xf]
      %v1707 = vld [vmem:[%s1690 + $0x40] sm:$0xf]
      %v1708 = vld [vmem:[%s1690 + $0x44] sm:$0xf]
      %v1709 = vld [vmem:[%s2] sm:$0x1]
      %v1711 = vlaneseq
      %v1712 = vshrl.u32 %v1711, 7
      %v1713 = vsub.s32 0, %v1712
      %v1714 = vrot.slane %v1709, %v1713
      %v1734 = vunpack.c.l.b16 %v1691
      %v1735 = vunpack.c.l.b16 %v1692
      %v1736 = vunpack.c.l.b16 %v1693
      %v1737 = vunpack.c.l.b16 %v1694
      %v1738 = vunpack.c.l.b16 %v1695
      %v1739 = vunpack.c.l.b16 %v1696
      %v1740 = vunpack.c.l.b16 %v1697
      %v1741 = vunpack.c.l.b16 %v1698
      %v1742 = vunpack.c.l.b16 %v1699
      %v1743 = vunpack.c.l.b16 %v1700
      %v1744 = vunpack.c.l.b16 %v1701
      %v1745 = vunpack.c.l.b16 %v1702
      %v1746 = vunpack.c.l.b16 %v1703
      %v1747 = vunpack.c.l.b16 %v1704
      %v1748 = vunpack.c.l.b16 %v1705
      %v1749 = vunpack.c.l.b16 %v1706
      %v1750 = vunpack.c.l.b16 %v1707
      %v1751 = vunpack.c.l.b16 %v1708
      %v1752 = vpack.c.b16 %v1735, %v1734
      %v1753 = vpack.c.b16 %v1737, %v1736
      %v1754 = vpack.c.b16 %v1739, %v1738
      %v1755 = vpack.c.b16 %v1741, %v1740
      %v1756 = vpack.c.b16 %v1743, %v1742
      %v1757 = vpack.c.b16 %v1745, %v1744
      %v1758 = vpack.c.b16 %v1747, %v1746
      %v1759 = vpack.c.b16 %v1749, %v1748
      %v1760 = vpack.c.b16 %v1751, %v1750
      %v1771 = vsel %vm1233, %v1689, 0
      %1773 = vmatprep.subr.bf16.mxu0 0
      %1774 = vmatpush1.bf16.msra.mxu0 %v1752
      %1775 = vmatprep.subr.bf16.mxu0 0
      %1776 = vmatpush1.bf16.msra.mxu0 %v1753
      %1777 = vmatprep.subr.bf16.mxu0 0
      %1778 = vmatpush1.bf16.msra.mxu0 %v1754
      %1779 = vmatprep.subr.bf16.mxu0 0
      %1780 = vmatpush1.bf16.msra.mxu0 %v1755
      %1781 = vmatprep.subr.bf16.mxu0 0
      %1782 = vmatpush1.bf16.msra.mxu0 %v1756
      %1783 = vmatprep.subr.bf16.mxu0 0
      %1784 = vmatpush1.bf16.msra.mxu0 %v1757
      %1785 = vmatprep.subr.bf16.mxu0 0
      %1786 = vmatpush1.bf16.msra.mxu0 %v1758
      %1787 = vmatprep.subr.bf16.mxu0 0
      %1788 = vmatpush1.bf16.msra.mxu0 %v1759
      %1789 = vmatprep.subr.bf16.mxu0 0
      %1790 = vmatpush1.bf16.msra.mxu0 %v1760
      %1791 = vmatprep.subr.bf16.mxu0 0
      %1792 = vmatpush1.bf16.msra.mxu0 0
      %1793 = vmatprep.subr.bf16.mxu0 0
      %1794 = vmatpush1.bf16.msra.mxu0 0
      %1795 = vmatprep.subr.bf16.mxu0 0
      %1796 = vmatpush1.bf16.msra.mxu0 0
      %1797 = vmatprep.subr.bf16.mxu0 0
      %1798 = vmatpush1.bf16.msra.mxu0 0
      %1799 = vmatprep.subr.bf16.mxu0 0
      %1800 = vmatpush1.bf16.msra.mxu0 0
      %1801 = vmatprep.subr.bf16.mxu0 0
      %1802 = vmatpush1.bf16.msra.mxu0 0
      %1803 = vmatprep.subr.bf16.mxu0 0
      %1804 = vmatpush1.bf16.msra.mxu0 0
      %1805 = vmatprep.mubr.bf16.mxu0 %v1238
      %1806 = vmatmul.mubr.bf16.gmra.mrb[0].mxu0 %v1124
      %v1807 = vpop.f32.mrb[0].mxu0
      %v1808 = vadd.f32 %v1714, %v1807
      %v1809 = vpop.f32.mrb[0].mxu0
      %v1810 = vpop.f32.mrb[0].mxu0
      %v1811 = vadd.f32 %v1714, %v1810
      %v1812 = vpop.f32.mrb[0].mxu0
      %1813 = vmatprep.mubr.bf16.mxu0 %v1241
      %1814 = vmatmul.mubr.bf16.gmra.mrb[0].mxu0 %v1126
      %v1815 = vpop.f32.mrb[0].mxu0
      %v1816 = vadd.f32 %v1714, %v1815
      %v1817 = vpop.f32.mrb[0].mxu0
      %v1818 = vpop.f32.mrb[0].mxu0
      %v1819 = vadd.f32 %v1714, %v1818
      %v1820 = vpop.f32.mrb[0].mxu0
      %1821 = vmatprep.mubr.bf16.mxu0 %v1244
      %1822 = vmatmul.mubr.bf16.gmra.mrb[0].mxu0 %v1128
      %v1823 = vpop.f32.mrb[0].mxu0
      %v1824 = vadd.f32 %v1714, %v1823
      %v1825 = vpop.f32.mrb[0].mxu0
      %v1826 = vpop.f32.mrb[0].mxu0
      %v1827 = vadd.f32 %v1714, %v1826
      %v1828 = vpop.f32.mrb[0].mxu0
      %1829 = vmatprep.mubr.bf16.mxu0 %v1247
      %1830 = vmatmul.mubr.bf16.gmra.mrb[0].mxu0 %v1130
      %v1831 = vpop.f32.mrb[0].mxu0
      %v1832 = vadd.f32 %v1714, %v1831
      %v1833 = vpop.f32.mrb[0].mxu0
      %v1834 = vpop.f32.mrb[0].mxu0
      %v1835 = vadd.f32 %v1714, %v1834
      %v1836 = vpop.f32.mrb[0].mxu0
      %1837 = vmatprep.mubr.bf16.mxu0 %v1250
      %1838 = vmatmul.mubr.bf16.gmra.mrb[0].mxu0 %v1132
      %v1839 = vpop.f32.mrb[0].mxu0
      %v1840 = vadd.f32 %v1714, %v1839
      %v1841 = vpop.f32.mrb[0].mxu0
      %v1842 = vpop.f32.mrb[0].mxu0
      %v1843 = vadd.f32 %v1714, %v1842
      %v1844 = vpop.f32.mrb[0].mxu0
      %1845 = vmatprep.mubr.bf16.mxu0 %v1253
      %1846 = vmatmul.mubr.bf16.gmra.mrb[0].mxu0 %v1134
      %v1847 = vpop.f32.mrb[0].mxu0
      %v1848 = vadd.f32 %v1714, %v1847
      %v1849 = vpop.f32.mrb[0].mxu0
      %v1850 = vpop.f32.mrb[0].mxu0
      %v1851 = vadd.f32 %v1714, %v1850
      %v1852 = vpop.f32.mrb[0].mxu0
      %1853 = vmatprep.mubr.bf16.mxu0 %v1256
      %1854 = vmatmul.mubr.bf16.gmra.mrb[0].mxu0 %v1136
      %v1855 = vpop.f32.mrb[0].mxu0
      %v1856 = vadd.f32 %v1714, %v1855
      %v1857 = vpop.f32.mrb[0].mxu0
      %v1858 = vpop.f32.mrb[0].mxu0
      %v1859 = vadd.f32 %v1714, %v1858
      %v1860 = vpop.f32.mrb[0].mxu0
      %1861 = vmatprep.mubr.bf16.mxu0 %v1259
      %1862 = vmatmul.mubr.bf16.gmra.mrb[0].mxu0 %v1138
      %v1863 = vpop.f32.mrb[0].mxu0
      %v1864 = vadd.f32 %v1714, %v1863
      %v1865 = vpop.f32.mrb[0].mxu0
      %v1866 = vpop.f32.mrb[0].mxu0
      %v1867 = vadd.f32 %v1714, %v1866
      %v1868 = vpop.f32.mrb[0].mxu0
      %1869 = vmatprep.mubr.bf16.mxu0 %v1262
      %1870 = vmatmul.mubr.bf16.gmra.mrb[0].mxu0 %v1140
      %v1871 = vpop.f32.mrb[0].mxu0
      %v1872 = vadd.f32 %v1714, %v1871
      %v1873 = vpop.f32.mrb[0].mxu0
      %v1874 = vpop.f32.mrb[0].mxu0
      %v1875 = vadd.f32 %v1714, %v1874
      %v1876 = vpop.f32.mrb[0].mxu0
      %1877 = vmatprep.mubr.bf16.mxu0 %v1265
      %1878 = vmatmul.mubr.bf16.gmra.mrb[0].mxu0 %v1142
      %v1879 = vpop.f32.mrb[0].mxu0
      %v1880 = vadd.f32 %v1714, %v1879
      %v1881 = vpop.f32.mrb[0].mxu0
      %v1882 = vpop.f32.mrb[0].mxu0
      %v1883 = vadd.f32 %v1714, %v1882
      %v1884 = vpop.f32.mrb[0].mxu0
      %1885 = vmatprep.mubr.bf16.mxu0 %v1268
      %1886 = vmatmul.mubr.bf16.gmra.mrb[0].mxu0 %v1144
      %v1887 = vpop.f32.mrb[0].mxu0
      %v1888 = vadd.f32 %v1714, %v1887
      %v1889 = vpop.f32.mrb[0].mxu0
      %v1890 = vpop.f32.mrb[0].mxu0
      %v1891 = vadd.f32 %v1714, %v1890
      %v1892 = vpop.f32.mrb[0].mxu0
      %1893 = vmatprep.mubr.bf16.mxu0 %v1271
      %1894 = vmatmul.mubr.bf16.gmra.mrb[0].mxu0 %v1146
      %v1895 = vpop.f32.mrb[0].mxu0
      %v1896 = vadd.f32 %v1714, %v1895
      %v1897 = vpop.f32.mrb[0].mxu0
      %v1898 = vpop.f32.mrb[0].mxu0
      %v1899 = vadd.f32 %v1714, %v1898
      %v1900 = vpop.f32.mrb[0].mxu0
      %1901 = vmatprep.mubr.bf16.mxu0 %v1274
      %1902 = vmatmul.mubr.bf16.gmra.mrb[0].mxu0 %v1148
      %v1903 = vpop.f32.mrb[0].mxu0
      %v1904 = vadd.f32 %v1714, %v1903
      %v1905 = vpop.f32.mrb[0].mxu0
      %v1906 = vpop.f32.mrb[0].mxu0
      %v1907 = vadd.f32 %v1714, %v1906
      %v1908 = vpop.f32.mrb[0].mxu0
      %1909 = vmatprep.mubr.bf16.mxu0 %v1277
      %1910 = vmatmul.mubr.bf16.gmra.mrb[0].mxu0 %v1150
      %v1911 = vpop.f32.mrb[0].mxu0
      %v1912 = vadd.f32 %v1714, %v1911
      %v1913 = vpop.f32.mrb[0].mxu0
      %v1914 = vpop.f32.mrb[0].mxu0
      %v1915 = vadd.f32 %v1714, %v1914
      %v1916 = vpop.f32.mrb[0].mxu0
      %1917 = vmatprep.mubr.bf16.mxu0 %v1280
      %1918 = vmatmul.mubr.bf16.gmra.mrb[0].mxu0 %v1152
      %v1919 = vpop.f32.mrb[0].mxu0
      %v1920 = vadd.f32 %v1714, %v1919
      %v1921 = vpop.f32.mrb[0].mxu0
      %v1922 = vpop.f32.mrb[0].mxu0
      %v1923 = vadd.f32 %v1714, %v1922
      %v1924 = vpop.f32.mrb[0].mxu0
      %1925 = vmatprep.mubr.bf16.mxu0 %v1771
      %1926 = vmatmul.mubr.bf16.gmra.mrb[0].mxu0 %v1688
      %v1927 = vpop.f32.mrb[0].mxu0
      %v1928 = vadd.f32 %v1714, %v1927
      %v1929 = vpop.f32.mrb[0].mxu0
      %v1930 = vpop.f32.mrb[0].mxu0
      %v1931 = vadd.f32 %v1714, %v1930
      %v1932 = vpop.f32.mrb[0].mxu0
      %1933 = vdwg.mxu0
      %v1934 = vadd.f32 %v1808, 3.0
      %v1935 = vadd.f32 %v1811, 3.0
      %v1936 = vadd.f32 %v1816, 3.0
      %v1937 = vadd.f32 %v1819, 3.0
      %v1938 = vadd.f32 %v1824, 3.0
      %v1939 = vadd.f32 %v1827, 3.0
      %v1940 = vadd.f32 %v1832, 3.0
      %v1941 = vadd.f32 %v1835, 3.0
      %v1942 = vadd.f32 %v1840, 3.0
      %v1943 = vadd.f32 %v1843, 3.0
      %v1944 = vadd.f32 %v1848, 3.0
      %v1945 = vadd.f32 %v1851, 3.0
      %v1946 = vadd.f32 %v1856, 3.0
      %v1947 = vadd.f32 %v1859, 3.0
      %v1948 = vadd.f32 %v1864, 3.0
      %v1949 = vadd.f32 %v1867, 3.0
      %v1950 = vadd.f32 %v1872, 3.0
      %v1951 = vadd.f32 %v1875, 3.0
      %v1952 = vadd.f32 %v1880, 3.0
      %v1953 = vadd.f32 %v1883, 3.0
      %v1954 = vadd.f32 %v1888, 3.0
      %v1955 = vadd.f32 %v1891, 3.0
      %v1956 = vadd.f32 %v1896, 3.0
      %v1957 = vadd.f32 %v1899, 3.0
      %v1958 = vadd.f32 %v1904, 3.0
      %v1959 = vadd.f32 %v1907, 3.0
      %v1960 = vadd.f32 %v1912, 3.0
      %v1961 = vadd.f32 %v1915, 3.0
      %v1962 = vadd.f32 %v1920, 3.0
      %v1963 = vadd.f32 %v1923, 3.0
      %v1964 = vadd.f32 %v1928, 3.0
      %v1965 = vadd.f32 %v1931, 3.0
      %v1966 = vmax.f32 %v1934, 0.0
      %v1967 = vmax.f32 %v1935, 0.0
      %v1968 = vmax.f32 %v1936, 0.0
      %v1969 = vmax.f32 %v1937, 0.0
      %v1970 = vmax.f32 %v1938, 0.0
      %v1971 = vmax.f32 %v1939, 0.0
      %v1972 = vmax.f32 %v1940, 0.0
      %v1973 = vmax.f32 %v1941, 0.0
      %v1974 = vmax.f32 %v1942, 0.0
      %v1975 = vmax.f32 %v1943, 0.0
      %v1976 = vmax.f32 %v1944, 0.0
      %v1977 = vmax.f32 %v1945, 0.0
      %v1978 = vmax.f32 %v1946, 0.0
      %v1979 = vmax.f32 %v1947, 0.0
      %v1980 = vmax.f32 %v1948, 0.0
      %v1981 = vmax.f32 %v1949, 0.0
      %v1982 = vmax.f32 %v1950, 0.0
      %v1983 = vmax.f32 %v1951, 0.0
      %v1984 = vmax.f32 %v1952, 0.0
      %v1985 = vmax.f32 %v1953, 0.0
      %v1986 = vmax.f32 %v1954, 0.0
      %v1987 = vmax.f32 %v1955, 0.0
      %v1988 = vmax.f32 %v1956, 0.0
      %v1989 = vmax.f32 %v1957, 0.0
      %v1990 = vmax.f32 %v1958, 0.0
      %v1991 = vmax.f32 %v1959, 0.0
      %v1992 = vmax.f32 %v1960, 0.0
      %v1993 = vmax.f32 %v1961, 0.0
      %v1994 = vmax.f32 %v1962, 0.0
      %v1995 = vmax.f32 %v1963, 0.0
      %v1996 = vmax.f32 %v1964, 0.0
      %v1997 = vmax.f32 %v1965, 0.0
      %v1998 = vmin.f32 %v1966, 6.0
      %v1999 = vmin.f32 %v1967, 6.0
      %v2000 = vmin.f32 %v1968, 6.0
      %v2001 = vmin.f32 %v1969, 6.0
      %v2002 = vmin.f32 %v1970, 6.0
      %v2003 = vmin.f32 %v1971, 6.0
      %v2004 = vmin.f32 %v1972, 6.0
      %v2005 = vmin.f32 %v1973, 6.0
      %v2006 = vmin.f32 %v1974, 6.0
      %v2007 = vmin.f32 %v1975, 6.0
      %v2008 = vmin.f32 %v1976, 6.0
      %v2009 = vmin.f32 %v1977, 6.0
      %v2010 = vmin.f32 %v1978, 6.0
      %v2011 = vmin.f32 %v1979, 6.0
      %v2012 = vmin.f32 %v1980, 6.0
      %v2013 = vmin.f32 %v1981, 6.0
      %v2014 = vmin.f32 %v1982, 6.0
      %v2015 = vmin.f32 %v1983, 6.0
      %v2016 = vmin.f32 %v1984, 6.0
      %v2017 = vmin.f32 %v1985, 6.0
      %v2018 = vmin.f32 %v1986, 6.0
      %v2019 = vmin.f32 %v1987, 6.0
      %v2020 = vmin.f32 %v1988, 6.0
      %v2021 = vmin.f32 %v1989, 6.0
      %v2022 = vmin.f32 %v1990, 6.0
      %v2023 = vmin.f32 %v1991, 6.0
      %v2024 = vmin.f32 %v1992, 6.0
      %v2025 = vmin.f32 %v1993, 6.0
      %v2026 = vmin.f32 %v1994, 6.0
      %v2027 = vmin.f32 %v1995, 6.0
      %v2028 = vmin.f32 %v1996, 6.0
      %v2029 = vmin.f32 %v1997, 6.0
      %v2030 = vmul.f32 %v1808, %v1998
      %v2031 = vmul.f32 %v1811, %v1999
      %v2032 = vmul.f32 %v1816, %v2000
      %v2033 = vmul.f32 %v1819, %v2001
      %v2034 = vmul.f32 %v1824, %v2002
      %v2035 = vmul.f32 %v1827, %v2003
      %v2036 = vmul.f32 %v1832, %v2004
      %v2037 = vmul.f32 %v1835, %v2005
      %v2038 = vmul.f32 %v1840, %v2006
      %v2039 = vmul.f32 %v1843, %v2007
      %v2040 = vmul.f32 %v1848, %v2008
      %v2041 = vmul.f32 %v1851, %v2009
      %v2042 = vmul.f32 %v1856, %v2010
      %v2043 = vmul.f32 %v1859, %v2011
      %v2044 = vmul.f32 %v1864, %v2012
      %v2045 = vmul.f32 %v1867, %v2013
      %v2046 = vmul.f32 %v1872, %v2014
      %v2047 = vmul.f32 %v1875, %v2015
      %v2048 = vmul.f32 %v1880, %v2016
      %v2049 = vmul.f32 %v1883, %v2017
      %v2050 = vmul.f32 %v1888, %v2018
      %v2051 = vmul.f32 %v1891, %v2019
      %v2052 = vmul.f32 %v1896, %v2020
      %v2053 = vmul.f32 %v1899, %v2021
      %v2054 = vmul.f32 %v1904, %v2022
      %v2055 = vmul.f32 %v1907, %v2023
      %v2056 = vmul.f32 %v1912, %v2024
      %v2057 = vmul.f32 %v1915, %v2025
      %v2058 = vmul.f32 %v1920, %v2026
      %v2059 = vmul.f32 %v1923, %v2027
      %v2060 = vmul.f32 %v1928, %v2028
      %v2061 = vmul.f32 %v1931, %v2029
      %v2062 = vmul.f32 %v2030, 0.16666667
      %v2063 = vmul.f32 %v2031, 0.16666667
      %v2064 = vmul.f32 %v2032, 0.16666667
      %v2065 = vmul.f32 %v2033, 0.16666667
      %v2066 = vmul.f32 %v2034, 0.16666667
      %v2067 = vmul.f32 %v2035, 0.16666667
      %v2068 = vmul.f32 %v2036, 0.16666667
      %v2069 = vmul.f32 %v2037, 0.16666667
      %v2070 = vmul.f32 %v2038, 0.16666667
      %v2071 = vmul.f32 %v2039, 0.16666667
      %v2072 = vmul.f32 %v2040, 0.16666667
      %v2073 = vmul.f32 %v2041, 0.16666667
      %v2074 = vmul.f32 %v2042, 0.16666667
      %v2075 = vmul.f32 %v2043, 0.16666667
      %v2076 = vmul.f32 %v2044, 0.16666667
      %v2077 = vmul.f32 %v2045, 0.16666667
      %v2078 = vmul.f32 %v2046, 0.16666667
      %v2079 = vmul.f32 %v2047, 0.16666667
      %v2080 = vmul.f32 %v2048, 0.16666667
      %v2081 = vmul.f32 %v2049, 0.16666667
      %v2082 = vmul.f32 %v2050, 0.16666667
      %v2083 = vmul.f32 %v2051, 0.16666667
      %v2084 = vmul.f32 %v2052, 0.16666667
      %v2085 = vmul.f32 %v2053, 0.16666667
      %v2086 = vmul.f32 %v2054, 0.16666667
      %v2087 = vmul.f32 %v2055, 0.16666667
      %v2088 = vmul.f32 %v2056, 0.16666667
      %v2089 = vmul.f32 %v2057, 0.16666667
      %v2090 = vmul.f32 %v2058, 0.16666667
      %v2091 = vmul.f32 %v2059, 0.16666667
      %v2092 = vmul.f32 %v2060, 0.16666667
      %v2093 = vmul.f32 %v2061, 0.16666667
      %s2094 = scalar_lea.vmem %s194, 256
      %2095 = vst.msk [vmem:[%s2094] sm:$0xff] %vm990, %v2062
      %2096 = vst.msk [vmem:[%s2094 + $0x8] sm:$0xff] %vm990, %v2063
      %2097 = vst.msk [vmem:[%s2094 + $0x10] sm:$0xff] %vm990, %v2064
      %2098 = vst.msk [vmem:[%s2094 + $0x18] sm:$0xff] %vm990, %v2065
      %2099 = vst.msk [vmem:[%s2094 + $0x20] sm:$0xff] %vm990, %v2066
      %2100 = vst.msk [vmem:[%s2094 + $0x28] sm:$0xff] %vm990, %v2067
      %2101 = vst.msk [vmem:[%s2094 + $0x30] sm:$0xff] %vm990, %v2068
      %2102 = vst.msk [vmem:[%s2094 + $0x38] sm:$0xff] %vm990, %v2069
      %2103 = vst.msk [vmem:[%s2094 + $0x40] sm:$0xff] %vm990, %v2070
      %2104 = vst.msk [vmem:[%s2094 + $0x48] sm:$0xff] %vm990, %v2071
      %2105 = vst.msk [vmem:[%s2094 + $0x50] sm:$0xff] %vm990, %v2072
      %2106 = vst.msk [vmem:[%s2094 + $0x58] sm:$0xff] %vm990, %v2073
      %2107 = vst.msk [vmem:[%s2094 + $0x60] sm:$0xff] %vm990, %v2074
      %2108 = vst.msk [vmem:[%s2094 + $0x68] sm:$0xff] %vm990, %v2075
      %2109 = vst.msk [vmem:[%s2094 + $0x70] sm:$0xff] %vm990, %v2076
      %2110 = vst.msk [vmem:[%s2094 + $0x78] sm:$0xff] %vm990, %v2077
      %2111 = vst.msk [vmem:[%s2094 + $0x80] sm:$0xff] %vm990, %v2078
      %2112 = vst.msk [vmem:[%s2094 + $0x88] sm:$0xff] %vm990, %v2079
      %2113 = vst.msk [vmem:[%s2094 + $0x90] sm:$0xff] %vm990, %v2080
      %2114 = vst.msk [vmem:[%s2094 + $0x98] sm:$0xff] %vm990, %v2081
      %2115 = vst.msk [vmem:[%s2094 + $0xa0] sm:$0xff] %vm990, %v2082
      %2116 = vst.msk [vmem:[%s2094 + $0xa8] sm:$0xff] %vm990, %v2083
      %2117 = vst.msk [vmem:[%s2094 + $0xb0] sm:$0xff] %vm990, %v2084
      %2118 = vst.msk [vmem:[%s2094 + $0xb8] sm:$0xff] %vm990, %v2085
      %2119 = vst.msk [vmem:[%s2094 + $0xc0] sm:$0xff] %vm990, %v2086
      %2120 = vst.msk [vmem:[%s2094 + $0xc8] sm:$0xff] %vm990, %v2087
      %2121 = vst.msk [vmem:[%s2094 + $0xd0] sm:$0xff] %vm990, %v2088
      %2122 = vst.msk [vmem:[%s2094 + $0xd8] sm:$0xff] %vm990, %v2089
      %2123 = vst.msk [vmem:[%s2094 + $0xe0] sm:$0xff] %vm990, %v2090
      %2124 = vst.msk [vmem:[%s2094 + $0xe8] sm:$0xff] %vm990, %v2091
      %2125 = vst.msk [vmem:[%s2094 + $0xf0] sm:$0xff] %vm990, %v2092
      %2126 = vst.msk [vmem:[%s2094 + $0xf8] sm:$0xff] %vm990, %v2093
      %s2127 = smul.u32 16, %s19
      %p2128 = scmp.lt.s32.totalorder %s18, 1
      %s2129 = scalar_select %p2128, %s18, 1
      %p2130 = scmp.lt.s32.totalorder %s2127, 15
      %s2131 = scalar_select %p2130, %s2127, 15
      %s2132 = smul.addr %s2131, 2
      %s2133 = smul.addr %s2129, 64
      %s2134 = sadd.s32 %s2132, %s2133
      %s2135 = smul.addr %s2134, 8
      %s2136 = scalar_lea.vmem %s3, %s2135
      // Predicated region
      $region33: #{up_module_forward.1} parent=31 // pred_check
        %p2137 = pneg %p114
      $region34: #{up_module_forward.1} parent=31 // pred_check_branch
        %2139 = sbr.rel (%p2137) target = $region36
      $region35: #{up_module_forward.1} parent=31 // pred_region
        %s2140 = smul.u32 16, %s19
      $region36: #{up_module_forward.1} parent=31 // pred_fallthru
        _
    $region32: #{up_module_forward.1} parent=5 // pred_fallthru
      _
    %p2141 = scmp.le.s32.totalorder 2, %s9
    // Predicated region
    $region37: #{up_module_forward.1} parent=5 // pred_check
      %p2142 = pneg %p2141
    $region38: #{up_module_forward.1} parent=5 // pred_check_branch
      %2144 = sbr.rel (%p2142) target = $region40
    $region39: #{up_module_forward.1} parent=5 // pred_region
      %s2145 = ssub.s32 %s9, 2
      // Predicated region
      $region41: #{up_module_forward.1} parent=39 // pred_check
        %p2146 = pneg %p120
      $region42: #{up_module_forward.1} parent=39 // pred_check_branch
        %2148 = sbr.rel (%p2146) target = $region44
      $region43: #{up_module_forward.1} parent=39 // pred_region
        %s2149 = smul.u32 16, %s21
        %p2150 = scmp.lt.s32.totalorder %s20, 1
        %s2151 = scalar_select %p2150, %s20, 1
        %p2152 = scmp.lt.s32.totalorder %s2149, 15
        %s2153 = scalar_select %p2152, %s2149, 15
        %s2154 = smul.addr %s2153, 2
        %s2155 = smul.addr %s2151, 64
        %s2156 = sadd.s32 %s2154, %s2155
        %s2157 = smul.addr %s2156, 8
        %s2158 = scalar_lea.vmem %s3, %s2157
      $region44: #{up_module_forward.1} parent=39 // pred_fallthru
        _
    $region40: #{up_module_forward.1} parent=5 // pred_fallthru
      _
  $region6: #{up_module_forward.1} parent=0 // loop_footer
    %s13 = sadd.s32 1, %s9
  $region7: #{up_module_forward.1} parent=0 // loop_footer_branch
    %8 = sbr.rel target = $region3
  $region8: #{up_module_forward.1} parent=0 // loop_exit
    _

</llo_original>
